<compile_context>
chip_gen: v5e
topology: v5e:2x2
jax: 0.10.0
libtpu: 0.0.40
codegen_flags: <defaults>
</compile_context>

<pallas_src>
import functools

import jax
import jax.numpy as jnp
from jax.experimental import pallas as pl
from jax.experimental.pallas import tpu as pltpu


def _round_up(x, m):
    return ((x + m - 1) // m) * m


# ----------------------------------------------------------------------------
# Pallas kernels
# ----------------------------------------------------------------------------
def _conv_act_pool_kernel(w_ref, p_ref, b_ref, o_ref, acc_ref, *, n_taps):
    """Per pool-tap: acc += leaky_relu(W @ P_tap + b); last tap: out = acc/n_taps."""
    t = pl.program_id(1)

    @pl.when(t == 0)
    def _():
        acc_ref[...] = jnp.zeros_like(acc_ref)

    y = jnp.dot(w_ref[...], p_ref[...], preferred_element_type=jnp.float32)
    y = y + b_ref[...]                      # (Cout, 1): per-sublane broadcast
    y = jnp.where(y > 0, y, 0.01 * y)       # leaky_relu (PyTorch default slope)
    acc_ref[...] += y

    @pl.when(t == n_taps - 1)
    def _():
        o_ref[...] = (acc_ref[...] * (1.0 / n_taps)).astype(o_ref.dtype)


def _fc_stack_kernel(x_ref, w1_ref, b1_ref, w2_ref, b2_ref, w3_ref, b3_ref,
                     o_ref):
    """Fused fc1+relu -> fc2+relu -> fc3, all in transposed (features, batch)."""
    h = jnp.dot(w1_ref[...], x_ref[...], preferred_element_type=jnp.float32)
    h = jnp.maximum(h + b1_ref[...], 0.0)
    h = jnp.dot(w2_ref[...], h.astype(jnp.bfloat16),
                preferred_element_type=jnp.float32)
    h = jnp.maximum(h + b2_ref[...], 0.0)
    y = jnp.dot(w3_ref[...], h.astype(jnp.bfloat16),
                preferred_element_type=jnp.float32)
    o_ref[...] = (y + b3_ref[...]).astype(o_ref.dtype)


# ----------------------------------------------------------------------------
# Pallas wrappers
# ----------------------------------------------------------------------------
_TM_MAX = 512  # lane-tile cap: VMEM-safe on all generations (incl. v7x 64 MiB)


def conv_act_pool(p4, w2d, b):
    """p4: (4, K, M2) pool-tap patches, w2d: (Cout, K), b: (Cout,).

    Returns (Cout, M2) = avg_pool2x2(leaky_relu(conv)) in transposed layout.
    """
    n_taps, K, M2 = p4.shape
    cout = w2d.shape[0]
    TM = min(_TM_MAX, _round_up(M2, 128))
    M_pad = _round_up(M2, TM)
    if M_pad != M2:
        p4 = jnp.pad(p4, ((0, 0), (0, 0), (0, M_pad - M2)))

    kernel = functools.partial(_conv_act_pool_kernel, n_taps=n_taps)
    out = pl.pallas_call(
        kernel,
        out_shape=jax.ShapeDtypeStruct((cout, M_pad), jnp.float32),
        grid=(M_pad // TM, n_taps),
        in_specs=[
            pl.BlockSpec((cout, K), lambda i, t: (0, 0)),
            pl.BlockSpec((None, K, TM), lambda i, t: (t, 0, i)),
            pl.BlockSpec((cout, 1), lambda i, t: (0, 0)),
        ],
        out_specs=pl.BlockSpec((cout, TM), lambda i, t: (0, i)),
        scratch_shapes=[pltpu.VMEM((cout, TM), jnp.float32)],
        compiler_params=pltpu.CompilerParams(
            dimension_semantics=("parallel", "arbitrary")),
    )(w2d.astype(jnp.bfloat16),
      p4.astype(jnp.bfloat16),
      b.reshape(cout, 1).astype(jnp.float32))
    return out[:, :M2]


def fc_stack(xT, w1, b1, w2, b2, w3, b3):
    """xT: (400, N).  Fused fc1/fc2/fc3 -> (10, N), transposed layout."""
    K0, N = xT.shape
    n_out = w3.shape[0]
    TN = min(_TM_MAX, _round_up(N, 128))
    N_pad = _round_up(N, TN)
    if N_pad != N:
        xT = jnp.pad(xT, ((0, 0), (0, N_pad - N)))

    out = pl.pallas_call(
        _fc_stack_kernel,
        out_shape=jax.ShapeDtypeStruct((n_out, N_pad), jnp.float32),
        grid=(N_pad // TN,),
        in_specs=[
            pl.BlockSpec((K0, TN), lambda i: (0, i)),
            pl.BlockSpec(w1.shape, lambda i: (0, 0)),
            pl.BlockSpec((w1.shape[0], 1), lambda i: (0, 0)),
            pl.BlockSpec(w2.shape, lambda i: (0, 0)),
            pl.BlockSpec((w2.shape[0], 1), lambda i: (0, 0)),
            pl.BlockSpec(w3.shape, lambda i: (0, 0)),
            pl.BlockSpec((w3.shape[0], 1), lambda i: (0, 0)),
        ],
        out_specs=pl.BlockSpec((n_out, TN), lambda i: (0, i)),
        compiler_params=pltpu.CompilerParams(
            dimension_semantics=("parallel",)),
    )(xT.astype(jnp.bfloat16),
      w1.astype(jnp.bfloat16), b1.reshape(-1, 1).astype(jnp.float32),
      w2.astype(jnp.bfloat16), b2.reshape(-1, 1).astype(jnp.float32),
      w3.astype(jnp.bfloat16), b3.reshape(-1, 1).astype(jnp.float32))
    return out[:, :N]


# ----------------------------------------------------------------------------
# Glue: pool-tap im2col (pure JAX reshuffling; all math is in the kernels)
# ----------------------------------------------------------------------------
def im2col_pooled(x, kh, kw, pad):
    """x: (N, C, H, W) NCHW -> (4, K, M2) with K = C*kh*kw (Cin-major, matching
    torch weight.reshape(Cout, Cin*kh*kw)) and M2 = N*(OH//2)*(OW//2).

    Tap t = (py, px) holds the patches of the conv output positions
    (2i+py, 2j+px), i.e. the four taps of each 2x2 average-pool window.
    """
    N, C, H, W = x.shape
    if pad > 0:
        x = jnp.pad(x, ((0, 0), (0, 0), (pad, pad), (pad, pad)))
    OH = H + 2 * pad - kh + 1
    OW = W + 2 * pad - kw + 1
    OH2, OW2 = OH // 2, OW // 2
    taps = []
    for py in range(2):
        for px in range(2):
            cols = []
            for dy in range(kh):
                for dx in range(kw):
                    sl = x[:, :,
                           py + dy: py + dy + 2 * OH2: 2,
                           px + dx: px + dx + 2 * OW2: 2]   # (N, C, OH2, OW2)
                    cols.append(sl)
            p = jnp.stack(cols, axis=2)                      # (N, C, kh*kw, OH2, OW2)
            p = p.transpose(1, 2, 0, 3, 4).reshape(C * kh * kw, N * OH2 * OW2)
            taps.append(p)
    return jnp.stack(taps, axis=0), OH2, OW2                 # (4, K, M2)


# ----------------------------------------------------------------------------
# LeNet5 parameters + forward
# ----------------------------------------------------------------------------
def init_params(key):
    """Deterministic parameter init matching the PyTorch module's shapes."""
    def uniform(key, shape, fan_in):
        bound = 1.0 / jnp.sqrt(fan_in)
        return jax.random.uniform(key, shape, jnp.float32, -bound, bound)

    keys = jax.random.split(key, 10)
    return {
        # conv1: Conv2d(1, 6, 5x5, pad=2)
        "w_conv1": uniform(keys[0], (6, 1, 5, 5), 1 * 5 * 5),
        "b_conv1": uniform(keys[1], (6,), 1 * 5 * 5),
        # conv2: Conv2d(6, 16, 5x5)
        "w_conv2": uniform(keys[2], (16, 6, 5, 5), 6 * 5 * 5),
        "b_conv2": uniform(keys[3], (16,), 6 * 5 * 5),
        # fc1: Linear(400, 120)
        "w_fc1": uniform(keys[4], (120, 400), 400),
        "b_fc1": uniform(keys[5], (120,), 400),
        # fc2: Linear(120, 84)
        "w_fc2": uniform(keys[6], (84, 120), 120),
        "b_fc2": uniform(keys[7], (84,), 120),
        # fc3: Linear(84, 10)
        "w_fc3": uniform(keys[8], (10, 84), 84),
        "b_fc3": uniform(keys[9], (10,), 84),
    }


def lenet5_forward(x, params):
    """x: (N, 1, 28, 28) NCHW float32 -> logits (N, 10)."""
    N = x.shape[0]

    # conv1(pad=2) + leaky_relu + avg_pool 2x2, fused  -> (6, N*14*14)
    p4, OH2, OW2 = im2col_pooled(x, 5, 5, pad=2)
    y = conv_act_pool(p4, params["w_conv1"].reshape(6, -1), params["b_conv1"])
    y = y.reshape(6, N, OH2, OW2).transpose(1, 0, 2, 3)      # (N, 6, 14, 14)

    # conv2(no pad) + leaky_relu + avg_pool 2x2, fused -> (16, N*5*5)
    p4, OH2, OW2 = im2col_pooled(y, 5, 5, pad=0)
    y = conv_act_pool(p4, params["w_conv2"].reshape(16, -1), params["b_conv2"])
    # flatten in torch .view(N, 16*5*5) order, kept transposed: (400, N)
    y = y.reshape(16, N, OH2, OW2).transpose(0, 2, 3, 1)
    y = y.reshape(16 * OH2 * OW2, N)

    # fused fc1+relu / fc2+relu / fc3 -> (10, N) -> (N, 10)
    out = fc_stack(y,
                   params["w_fc1"], params["b_fc1"],
                   params["w_fc2"], params["b_fc2"],
                   params["w_fc3"], params["b_fc3"])
    return out.T


if __name__ == "__main__":
    key = jax.random.PRNGKey(0)
    k_params, k_x = jax.random.split(key)
    params = init_params(k_params)

    # LeNet5's fc1 (16*5*5 inputs) implies 28x28 spatial input; batch=2.
    x = jax.random.normal(k_x, (2, 1, 28, 28), dtype=jnp.float32)

    fwd = jax.jit(lenet5_forward)
    out = fwd(x, params)
    out = jax.block_until_ready(out)
    assert out.shape == (2, 10), out.shape
    print("KERNEL_OK")
</pallas_src>

<mosaic_0001>
module attributes {stable_mosaic.version = 11 : i64} {
  func.func @_conv_act_pool_kernel(%arg0: i32, %arg1: i32, %arg2: memref<6x25xbf16, #tpu.memory_space<vmem>>, %arg3: memref<1x25x512xbf16, #tpu.memory_space<vmem>>, %arg4: memref<6x1xf32, #tpu.memory_space<vmem>>, %arg5: memref<6x512xf32, #tpu.memory_space<vmem>>, %arg6: memref<6x512xf32, #tpu.memory_space<vmem>>) attributes {dimension_semantics = [#tpu.dimension_semantics<parallel>, #tpu.dimension_semantics<arbitrary>], iteration_bounds = array<i64: 1, 4>, scalar_prefetch = 0 : i64, scratch_operands = 1 : i64, tpu.core_type = #tpu.core_type<tc>, window_params = [{pipeline_mode = #tpu.pipeline_mode<synchronous>, transform_indices = @transform_0, window_bounds = array<i64: 6, 25>}, {transform_indices = @transform_1, window_bounds = array<i64: 1, 25, 512>}, {pipeline_mode = #tpu.pipeline_mode<synchronous>, transform_indices = @transform_2, window_bounds = array<i64: 6, 1>}, {transform_indices = @transform_3, window_bounds = array<i64: 6, 512>}]} {
    %c0_i32 = arith.constant 0 : i32
    %0 = arith.cmpi eq, %arg1, %c0_i32 : i32
    %1 = arith.extui %0 : i1 to i32
    %c0_i32_0 = arith.constant 0 : i32
    %2 = arith.cmpi ne, %1, %c0_i32_0 : i32
    scf.if %2 {
      %cst_14 = arith.constant 0.000000e+00 : f32
      %21 = vector.broadcast %cst_14 : f32 to vector<6x512xf32>
      %c0_15 = arith.constant 0 : index
      %c0_16 = arith.constant 0 : index
      %22 = vector.load %arg6[%c0_15, %c0_16] : memref<6x512xf32, #tpu.memory_space<vmem>>, vector<6x512xf32>
      tpu.vector_store %arg6[%c0_15, %c0_16], %21 {strides = array<i32>} : memref<6x512xf32, #tpu.memory_space<vmem>>, vector<6x512xf32>,
    } else {
    }
    %c0 = arith.constant 0 : index
    %c0_1 = arith.constant 0 : index
    %3 = vector.load %arg2[%c0, %c0_1] : memref<6x25xbf16, #tpu.memory_space<vmem>>, vector<6x25xbf16>
    %c0_2 = arith.constant 0 : index
    %c0_3 = arith.constant 0 : index
    %c0_4 = arith.constant 0 : index
    %4 = vector.load %arg3[%c0_2, %c0_3, %c0_4] : memref<1x25x512xbf16, #tpu.memory_space<vmem>>, vector<1x25x512xbf16>
    %5 = vector.shape_cast %4 : vector<1x25x512xbf16> to vector<25x512xbf16>
    %cst = arith.constant dense<0.000000e+00> : vector<6x512xf32>
    %6 = tpu.matmul %3, %5, %cst {dimension_numbers = #tpu.dot_dimension_numbers<[1], [0], [0], [1], [0, 0, 1, 1], [], []>} : vector<6x25xbf16>, vector<25x512xbf16>, vector<6x512xf32> -> vector<6x512xf32>
    %c0_5 = arith.constant 0 : index
    %c0_6 = arith.constant 0 : index
    %7 = vector.load %arg4[%c0_5, %c0_6] : memref<6x1xf32, #tpu.memory_space<vmem>>, vector<6x1xf32>
    %8 = vector.broadcast %7 : vector<6x1xf32> to vector<6x512xf32>
    %9 = arith.addf %6, %8 : vector<6x512xf32>
    %cst_7 = arith.constant 0.000000e+00 : f32
    %10 = vector.broadcast %cst_7 : f32 to vector<6x512xf32>
    %11 = arith.cmpf ogt, %9, %10 : vector<6x512xf32>
    %cst_8 = arith.constant 0.00999999977 : f32
    %12 = vector.broadcast %cst_8 : f32 to vector<6x512xf32>
    %13 = arith.mulf %12, %9 : vector<6x512xf32>
    %14 = arith.select %11, %9, %13 : vector<6x512xi1>, vector<6x512xf32>
    %c0_9 = arith.constant 0 : index
    %c0_10 = arith.constant 0 : index
    %15 = vector.load %arg6[%c0_9, %c0_10] : memref<6x512xf32, #tpu.memory_space<vmem>>, vector<6x512xf32>
    %16 = arith.addf %15, %14 : vector<6x512xf32>
    %c0_11 = arith.constant 0 : index
    %c0_12 = arith.constant 0 : index
    %17 = vector.load %arg6[%c0_11, %c0_12] : memref<6x512xf32, #tpu.memory_space<vmem>>, vector<6x512xf32>
    tpu.vector_store %arg6[%c0_11, %c0_12], %16 {strides = array<i32>} : memref<6x512xf32, #tpu.memory_space<vmem>>, vector<6x512xf32>,
    %c3_i32 = arith.constant 3 : i32
    %18 = arith.cmpi eq, %arg1, %c3_i32 : i32
    %19 = arith.extui %18 : i1 to i32
    %c0_i32_13 = arith.constant 0 : i32
    %20 = arith.cmpi ne, %19, %c0_i32_13 : i32
    scf.if %20 {
      %c0_14 = arith.constant 0 : index
      %c0_15 = arith.constant 0 : index
      %21 = vector.load %arg6[%c0_14, %c0_15] : memref<6x512xf32, #tpu.memory_space<vmem>>, vector<6x512xf32>
      %cst_16 = arith.constant 2.500000e-01 : f32
      %22 = vector.broadcast %cst_16 : f32 to vector<6x512xf32>
      %23 = arith.mulf %21, %22 : vector<6x512xf32>
      %c0_17 = arith.constant 0 : index
      %c0_18 = arith.constant 0 : index
      %24 = vector.load %arg5[%c0_17, %c0_18] : memref<6x512xf32, #tpu.memory_space<vmem>>, vector<6x512xf32>
      tpu.vector_store %arg5[%c0_17, %c0_18], %23 {strides = array<i32>} : memref<6x512xf32, #tpu.memory_space<vmem>>, vector<6x512xf32>,
    } else {
    }
    return
  }
  func.func @transform_0(%arg0: i32, %arg1: i32) -> (i32, i32) {
    %c0_i32 = arith.constant 0 : i32
    %c0_i32_0 = arith.constant 0 : i32
    %c0_i32_1 = arith.constant 0 : i32
    return %c0_i32, %c0_i32_0 : i32, i32
  }
  func.func @transform_1(%arg0: i32, %arg1: i32) -> (i32, i32, i32) {
    %c0_i32 = arith.constant 0 : i32
    %c0_i32_0 = arith.constant 0 : i32
    return %arg1, %c0_i32, %arg0 : i32, i32, i32
  }
  func.func @transform_2(%arg0: i32, %arg1: i32) -> (i32, i32) {
    %c0_i32 = arith.constant 0 : i32
    %c0_i32_0 = arith.constant 0 : i32
    %c0_i32_1 = arith.constant 0 : i32
    return %c0_i32, %c0_i32_0 : i32, i32
  }
  func.func @transform_3(%arg0: i32, %arg1: i32) -> (i32, i32) {
    %c0_i32 = arith.constant 0 : i32
    %c0_i32_0 = arith.constant 0 : i32
    return %c0_i32, %arg0 : i32, i32
  }
}

module attributes {stable_mosaic.version = 11 : i64} {
  func.func @_conv_act_pool_kernel(%arg0: i32, %arg1: i32, %arg2: memref<16x150xbf16, #tpu.memory_space<vmem>>, %arg3: memref<1x150x128xbf16, #tpu.memory_space<vmem>>, %arg4: memref<16x1xf32, #tpu.memory_space<vmem>>, %arg5: memref<16x128xf32, #tpu.memory_space<vmem>>, %arg6: memref<16x128xf32, #tpu.memory_space<vmem>>) attributes {dimension_semantics = [#tpu.dimension_semantics<parallel>, #tpu.dimension_semantics<arbitrary>], iteration_bounds = array<i64: 1, 4>, scalar_prefetch = 0 : i64, scratch_operands = 1 : i64, tpu.core_type = #tpu.core_type<tc>, window_params = [{pipeline_mode = #tpu.pipeline_mode<synchronous>, transform_indices = @transform_0, window_bounds = array<i64: 16, 150>}, {transform_indices = @transform_1, window_bounds = array<i64: 1, 150, 128>}, {pipeline_mode = #tpu.pipeline_mode<synchronous>, transform_indices = @transform_2, window_bounds = array<i64: 16, 1>}, {transform_indices = @transform_3, window_bounds = array<i64: 16, 128>}]} {
    %c0_i32 = arith.constant 0 : i32
    %0 = arith.cmpi eq, %arg1, %c0_i32 : i32
    %1 = arith.extui %0 : i1 to i32
    %c0_i32_0 = arith.constant 0 : i32
    %2 = arith.cmpi ne, %1, %c0_i32_0 : i32
    scf.if %2 {
      %cst_14 = arith.constant 0.000000e+00 : f32
      %21 = vector.broadcast %cst_14 : f32 to vector<16x128xf32>
      %c0_15 = arith.constant 0 : index
      %c0_16 = arith.constant 0 : index
      %22 = vector.load %arg6[%c0_15, %c0_16] : memref<16x128xf32, #tpu.memory_space<vmem>>, vector<16x128xf32>
      tpu.vector_store %arg6[%c0_15, %c0_16], %21 {strides = array<i32>} : memref<16x128xf32, #tpu.memory_space<vmem>>, vector<16x128xf32>,
    } else {
    }
    %c0 = arith.constant 0 : index
    %c0_1 = arith.constant 0 : index
    %3 = vector.load %arg2[%c0, %c0_1] : memref<16x150xbf16, #tpu.memory_space<vmem>>, vector<16x150xbf16>
    %c0_2 = arith.constant 0 : index
    %c0_3 = arith.constant 0 : index
    %c0_4 = arith.constant 0 : index
    %4 = vector.load %arg3[%c0_2, %c0_3, %c0_4] : memref<1x150x128xbf16, #tpu.memory_space<vmem>>, vector<1x150x128xbf16>
    %5 = vector.shape_cast %4 : vector<1x150x128xbf16> to vector<150x128xbf16>
    %cst = arith.constant dense<0.000000e+00> : vector<16x128xf32>
    %6 = tpu.matmul %3, %5, %cst {dimension_numbers = #tpu.dot_dimension_numbers<[1], [0], [0], [1], [0, 0, 1, 1], [], []>} : vector<16x150xbf16>, vector<150x128xbf16>, vector<16x128xf32> -> vector<16x128xf32>
    %c0_5 = arith.constant 0 : index
    %c0_6 = arith.constant 0 : index
    %7 = vector.load %arg4[%c0_5, %c0_6] : memref<16x1xf32, #tpu.memory_space<vmem>>, vector<16x1xf32>
    %8 = vector.broadcast %7 : vector<16x1xf32> to vector<16x128xf32>
    %9 = arith.addf %6, %8 : vector<16x128xf32>
    %cst_7 = arith.constant 0.000000e+00 : f32
    %10 = vector.broadcast %cst_7 : f32 to vector<16x128xf32>
    %11 = arith.cmpf ogt, %9, %10 : vector<16x128xf32>
    %cst_8 = arith.constant 0.00999999977 : f32
    %12 = vector.broadcast %cst_8 : f32 to vector<16x128xf32>
    %13 = arith.mulf %12, %9 : vector<16x128xf32>
    %14 = arith.select %11, %9, %13 : vector<16x128xi1>, vector<16x128xf32>
    %c0_9 = arith.constant 0 : index
    %c0_10 = arith.constant 0 : index
    %15 = vector.load %arg6[%c0_9, %c0_10] : memref<16x128xf32, #tpu.memory_space<vmem>>, vector<16x128xf32>
    %16 = arith.addf %15, %14 : vector<16x128xf32>
    %c0_11 = arith.constant 0 : index
    %c0_12 = arith.constant 0 : index
    %17 = vector.load %arg6[%c0_11, %c0_12] : memref<16x128xf32, #tpu.memory_space<vmem>>, vector<16x128xf32>
    tpu.vector_store %arg6[%c0_11, %c0_12], %16 {strides = array<i32>} : memref<16x128xf32, #tpu.memory_space<vmem>>, vector<16x128xf32>,
    %c3_i32 = arith.constant 3 : i32
    %18 = arith.cmpi eq, %arg1, %c3_i32 : i32
    %19 = arith.extui %18 : i1 to i32
    %c0_i32_13 = arith.constant 0 : i32
    %20 = arith.cmpi ne, %19, %c0_i32_13 : i32
    scf.if %20 {
      %c0_14 = arith.constant 0 : index
      %c0_15 = arith.constant 0 : index
      %21 = vector.load %arg6[%c0_14, %c0_15] : memref<16x128xf32, #tpu.memory_space<vmem>>, vector<16x128xf32>
      %cst_16 = arith.constant 2.500000e-01 : f32
      %22 = vector.broadcast %cst_16 : f32 to vector<16x128xf32>
      %23 = arith.mulf %21, %22 : vector<16x128xf32>
      %c0_17 = arith.constant 0 : index
      %c0_18 = arith.constant 0 : index
      %24 = vector.load %arg5[%c0_17, %c0_18] : memref<16x128xf32, #tpu.memory_space<vmem>>, vector<16x128xf32>
      tpu.vector_store %arg5[%c0_17, %c0_18], %23 {strides = array<i32>} : memref<16x128xf32, #tpu.memory_space<vmem>>, vector<16x128xf32>,
    } else {
    }
    return
  }
  func.func @transform_0(%arg0: i32, %arg1: i32) -> (i32, i32) {
    %c0_i32 = arith.constant 0 : i32
    %c0_i32_0 = arith.constant 0 : i32
    %c0_i32_1 = arith.constant 0 : i32
    return %c0_i32, %c0_i32_0 : i32, i32
  }
  func.func @transform_1(%arg0: i32, %arg1: i32) -> (i32, i32, i32) {
    %c0_i32 = arith.constant 0 : i32
    %c0_i32_0 = arith.constant 0 : i32
    return %arg1, %c0_i32, %arg0 : i32, i32, i32
  }
  func.func @transform_2(%arg0: i32, %arg1: i32) -> (i32, i32) {
    %c0_i32 = arith.constant 0 : i32
    %c0_i32_0 = arith.constant 0 : i32
    %c0_i32_1 = arith.constant 0 : i32
    return %c0_i32, %c0_i32_0 : i32, i32
  }
  func.func @transform_3(%arg0: i32, %arg1: i32) -> (i32, i32) {
    %c0_i32 = arith.constant 0 : i32
    %c0_i32_0 = arith.constant 0 : i32
    return %c0_i32, %arg0 : i32, i32
  }
}

module attributes {stable_mosaic.version = 11 : i64} {
  func.func @_fc_stack_kernel(%arg0: i32, %arg1: memref<400x128xbf16, #tpu.memory_space<vmem>>, %arg2: memref<120x400xbf16, #tpu.memory_space<vmem>>, %arg3: memref<120x1xf32, #tpu.memory_space<vmem>>, %arg4: memref<84x120xbf16, #tpu.memory_space<vmem>>, %arg5: memref<84x1xf32, #tpu.memory_space<vmem>>, %arg6: memref<10x84xbf16, #tpu.memory_space<vmem>>, %arg7: memref<10x1xf32, #tpu.memory_space<vmem>>, %arg8: memref<10x128xf32, #tpu.memory_space<vmem>>) attributes {dimension_semantics = [#tpu.dimension_semantics<parallel>], iteration_bounds = array<i64: 1>, scalar_prefetch = 0 : i64, scratch_operands = 0 : i64, tpu.core_type = #tpu.core_type<tc>, window_params = [{transform_indices = @transform_0, window_bounds = array<i64: 400, 128>}, {pipeline_mode = #tpu.pipeline_mode<synchronous>, transform_indices = @transform_1, window_bounds = array<i64: 120, 400>}, {pipeline_mode = #tpu.pipeline_mode<synchronous>, transform_indices = @transform_2, window_bounds = array<i64: 120, 1>}, {pipeline_mode = #tpu.pipeline_mode<synchronous>, transform_indices = @transform_3, window_bounds = array<i64: 84, 120>}, {pipeline_mode = #tpu.pipeline_mode<synchronous>, transform_indices = @transform_4, window_bounds = array<i64: 84, 1>}, {pipeline_mode = #tpu.pipeline_mode<synchronous>, transform_indices = @transform_5, window_bounds = array<i64: 10, 84>}, {pipeline_mode = #tpu.pipeline_mode<synchronous>, transform_indices = @transform_6, window_bounds = array<i64: 10, 1>}, {transform_indices = @transform_7, window_bounds = array<i64: 10, 128>}]} {
    %c0 = arith.constant 0 : index
    %c0_0 = arith.constant 0 : index
    %0 = vector.load %arg2[%c0, %c0_0] : memref<120x400xbf16, #tpu.memory_space<vmem>>, vector<120x400xbf16>
    %c0_1 = arith.constant 0 : index
    %c0_2 = arith.constant 0 : index
    %1 = vector.load %arg1[%c0_1, %c0_2] : memref<400x128xbf16, #tpu.memory_space<vmem>>, vector<400x128xbf16>
    %cst = arith.constant dense<0.000000e+00> : vector<120x128xf32>
    %2 = tpu.matmul %0, %1, %cst {dimension_numbers = #tpu.dot_dimension_numbers<[1], [0], [0], [1], [0, 0, 1, 1], [], []>} : vector<120x400xbf16>, vector<400x128xbf16>, vector<120x128xf32> -> vector<120x128xf32>
    %c0_3 = arith.constant 0 : index
    %c0_4 = arith.constant 0 : index
    %3 = vector.load %arg3[%c0_3, %c0_4] : memref<120x1xf32, #tpu.memory_space<vmem>>, vector<120x1xf32>
    %4 = vector.broadcast %3 : vector<120x1xf32> to vector<120x128xf32>
    %5 = arith.addf %2, %4 : vector<120x128xf32>
    %cst_5 = arith.constant 0.000000e+00 : f32
    %6 = vector.broadcast %cst_5 : f32 to vector<120x128xf32>
    %7 = arith.maximumf %5, %6 : vector<120x128xf32>
    %c0_6 = arith.constant 0 : index
    %c0_7 = arith.constant 0 : index
    %8 = vector.load %arg4[%c0_6, %c0_7] : memref<84x120xbf16, #tpu.memory_space<vmem>>, vector<84x120xbf16>
    %9 = arith.truncf %7 : vector<120x128xf32> to vector<120x128xbf16>
    %cst_8 = arith.constant dense<0.000000e+00> : vector<84x128xf32>
    %10 = tpu.matmul %8, %9, %cst_8 {dimension_numbers = #tpu.dot_dimension_numbers<[1], [0], [0], [1], [0, 0, 1, 1], [], []>} : vector<84x120xbf16>, vector<120x128xbf16>, vector<84x128xf32> -> vector<84x128xf32>
    %c0_9 = arith.constant 0 : index
    %c0_10 = arith.constant 0 : index
    %11 = vector.load %arg5[%c0_9, %c0_10] : memref<84x1xf32, #tpu.memory_space<vmem>>, vector<84x1xf32>
    %12 = vector.broadcast %11 : vector<84x1xf32> to vector<84x128xf32>
    %13 = arith.addf %10, %12 : vector<84x128xf32>
    %cst_11 = arith.constant 0.000000e+00 : f32
    %14 = vector.broadcast %cst_11 : f32 to vector<84x128xf32>
    %15 = arith.maximumf %13, %14 : vector<84x128xf32>
    %c0_12 = arith.constant 0 : index
    %c0_13 = arith.constant 0 : index
    %16 = vector.load %arg6[%c0_12, %c0_13] : memref<10x84xbf16, #tpu.memory_space<vmem>>, vector<10x84xbf16>
    %17 = arith.truncf %15 : vector<84x128xf32> to vector<84x128xbf16>
    %cst_14 = arith.constant dense<0.000000e+00> : vector<10x128xf32>
    %18 = tpu.matmul %16, %17, %cst_14 {dimension_numbers = #tpu.dot_dimension_numbers<[1], [0], [0], [1], [0, 0, 1, 1], [], []>} : vector<10x84xbf16>, vector<84x128xbf16>, vector<10x128xf32> -> vector<10x128xf32>
    %c0_15 = arith.constant 0 : index
    %c0_16 = arith.constant 0 : index
    %19 = vector.load %arg7[%c0_15, %c0_16] : memref<10x1xf32, #tpu.memory_space<vmem>>, vector<10x1xf32>
    %20 = vector.broadcast %19 : vector<10x1xf32> to vector<10x128xf32>
    %21 = arith.addf %18, %20 : vector<10x128xf32>
    %c0_17 = arith.constant 0 : index
    %c0_18 = arith.constant 0 : index
    %22 = vector.load %arg8[%c0_17, %c0_18] : memref<10x128xf32, #tpu.memory_space<vmem>>, vector<10x128xf32>
    tpu.vector_store %arg8[%c0_17, %c0_18], %21 {strides = array<i32>} : memref<10x128xf32, #tpu.memory_space<vmem>>, vector<10x128xf32>,
    return
  }
  func.func @transform_0(%arg0: i32) -> (i32, i32) {
    %c0_i32 = arith.constant 0 : i32
    %c0_i32_0 = arith.constant 0 : i32
    return %c0_i32, %arg0 : i32, i32
  }
  func.func @transform_1(%arg0: i32) -> (i32, i32) {
    %c0_i32 = arith.constant 0 : i32
    %c0_i32_0 = arith.constant 0 : i32
    %c0_i32_1 = arith.constant 0 : i32
    return %c0_i32, %c0_i32_0 : i32, i32
  }
  func.func @transform_2(%arg0: i32) -> (i32, i32) {
    %c0_i32 = arith.constant 0 : i32
    %c0_i32_0 = arith.constant 0 : i32
    %c0_i32_1 = arith.constant 0 : i32
    return %c0_i32, %c0_i32_0 : i32, i32
  }
  func.func @transform_3(%arg0: i32) -> (i32, i32) {
    %c0_i32 = arith.constant 0 : i32
    %c0_i32_0 = arith.constant 0 : i32
    %c0_i32_1 = arith.constant 0 : i32
    return %c0_i32, %c0_i32_0 : i32, i32
  }
  func.func @transform_4(%arg0: i32) -> (i32, i32) {
    %c0_i32 = arith.constant 0 : i32
    %c0_i32_0 = arith.constant 0 : i32
    %c0_i32_1 = arith.constant 0 : i32
    return %c0_i32, %c0_i32_0 : i32, i32
  }
  func.func @transform_5(%arg0: i32) -> (i32, i32) {
    %c0_i32 = arith.constant 0 : i32
    %c0_i32_0 = arith.constant 0 : i32
    %c0_i32_1 = arith.constant 0 : i32
    return %c0_i32, %c0_i32_0 : i32, i32
  }
  func.func @transform_6(%arg0: i32) -> (i32, i32) {
    %c0_i32 = arith.constant 0 : i32
    %c0_i32_0 = arith.constant 0 : i32
    %c0_i32_1 = arith.constant 0 : i32
    return %c0_i32, %c0_i32_0 : i32, i32
  }
  func.func @transform_7(%arg0: i32) -> (i32, i32) {
    %c0_i32 = arith.constant 0 : i32
    %c0_i32_0 = arith.constant 0 : i32
    return %c0_i32, %arg0 : i32, i32
  }
}

</mosaic_0001>

<llo_original>
// kernel: lenet5_forward.3
$region0: #{lenet5_forward.3}
  #allocation0 [shape = 'u32[]', space=smem, size = 0x4, offset = 0x4, fixed_abs, tag = 'smem constant byte address 0x4 - core index']
  #allocation1 [shape = 'u32[72,128]{1,0:T(1,128)}', space=vmem, size = 0x9000, scoped, tag = 'internal scratch']
  #allocation2 [shape = 'f32[6,512]{1,0:T(8,128)}', space=vmem, size = 0x4000, scoped, tag = 'scratch operand']
  %s0 = inlined_call_operand.vmem [shape: bf16[6,25], index: 0, kind: input, shape index: {}]
  %s1 = inlined_call_operand.vmem [shape: bf16[4,25,512], index: 1, kind: input, shape index: {}]
  %s2 = inlined_call_operand.vmem [shape: f32[6,1], index: 2, kind: input, shape index: {}]
  %s3 = inlined_call_operand.vmem [shape: f32[6,512], index: 3, kind: output, shape index: {}]
  %s4 = sld [smem:[#allocation0]]
  $region53: #{lenet5_forward.3} parent=0
    _
  %s6 = ssub.s32 1, %s4
  %s7 = scalar_select 0, %s6, %s4
  loop: start=0, step=1, limit=6
  $region2: #{lenet5_forward.3} parent=0 // loop_pre_header
    _
  $region3: #{lenet5_forward.3} parent=0 // loop_header
    %s9 = sphi 0, %s13
    %p10 = scmp.ge.s32.totalorder %s9, 6
    %s16 = sphi 0, %s28
    %s17 = sphi 0, %s24
    %s18 = sphi 0, %s16
    %s19 = sphi 0, %s17
    %s20 = sphi 0, %s18
    %s21 = sphi 0, %s19
    %s29 = sphi 0, %s29
    %s31 = sphi 0, %s29
    %s32 = sphi 0, %s31
    %s46 = sphi 0, %s32
    %s54 = sphi 0, %s56
    %s57 = sphi 0, %s54
    %s58 = sphi 0, %s57
    %s74 = sphi 0, %s58
    %s78 = sphi 0, %s78
    %s80 = sphi 0, %s78
    %s81 = sphi 0, %s80
    %s95 = sphi 0, %s81
    %s101 = sphi 0, %s103
    %s104 = sphi 0, %s101
    %s105 = sphi 0, %s104
    %s121 = sphi 0, %s105
  $region4: #{lenet5_forward.3} parent=0 // loop_header_branch
    %12 = sbr.rel (%p10) target = $region8
  $region5: #{lenet5_forward.3} parent=0 // loop_body
    %s14 = ssub.s32 %s9, 1
    %s15 = ssub.s32 %s9, 2
    %s22 = sadd.s32 1, %s17
    %p23 = scmp.ge.s32.totalorder %s22, 4
    %s24 = scalar_select %p23, 0, %s22
    %s25 = sadd.s32 1, %s16
    %s26 = scalar_select %p23, %s25, %s16
    %p27 = scmp.ge.s32.totalorder %s26, 1
    %s28 = scalar_select %p27, 0, %s26
    %s30 = sadd.s32 %s29, 1
    %p33 = scmp.eq.s32.totalorder %s9, 3
    %p34 = scmp.ne.s32.totalorder %s29, %s31
    %p35 = scmp.eq.s32.totalorder %s9, 0
    %p36 = por %p34, %p35
    %p37 = scmp.ne.s32.totalorder %s29, %s31
    %p38 = scmp.eq.s32.totalorder %s14, 3
    %p39 = por %p37, %p38
    %p40 = scmp.ne.s32.totalorder %s31, %s32
    %p41 = scmp.eq.s32.totalorder %s14, 0
    %p42 = por %p40, %p41
    %p43 = scmp.ne.s32.totalorder %s31, %s32
    %p44 = scmp.eq.s32.totalorder %s15, 3
    %p45 = por %p43, %p44
    %p47 = scmp.ne.s32.totalorder %s32, %s46
    %p48 = scmp.eq.s32.totalorder %s15, 0
    %p49 = por %p47, %p48
    %s50 = ssub.s32 %s17, %s24
    %s51 = ssub.s32 %s16, %s28
    %s52 = sor.u32 %s50, %s51
    %p53 = scmp.eq.s32.totalorder %s52, 0
    %s55 = sadd.s32 %s54, 1
    %s56 = scalar_select %p53, %s54, %s55
    %p59 = pneg %p53
    %p60 = scmp.eq.s32.totalorder %s9, 3
    %p61 = por %p59, %p60
    %p62 = scmp.ne.s32.totalorder %s54, %s57
    %p63 = scmp.eq.s32.totalorder %s9, 0
    %p64 = por %p62, %p63
    %p65 = scmp.ne.s32.totalorder %s54, %s57
    %p66 = scmp.eq.s32.totalorder %s14, 3
    %p67 = por %p65, %p66
    %p68 = scmp.ne.s32.totalorder %s57, %s58
    %p69 = scmp.eq.s32.totalorder %s14, 0
    %p70 = por %p68, %p69
    %p71 = scmp.ne.s32.totalorder %s57, %s58
    %p72 = scmp.eq.s32.totalorder %s15, 3
    %p73 = por %p71, %p72
    %p75 = scmp.ne.s32.totalorder %s58, %s74
    %p76 = scmp.eq.s32.totalorder %s15, 0
    %p77 = por %p75, %p76
    %s79 = sadd.s32 %s78, 1
    %p82 = scmp.eq.s32.totalorder %s9, 3
    %p83 = scmp.ne.s32.totalorder %s78, %s80
    %p84 = scmp.eq.s32.totalorder %s9, 0
    %p85 = por %p83, %p84
    %p86 = scmp.ne.s32.totalorder %s78, %s80
    %p87 = scmp.eq.s32.totalorder %s14, 3
    %p88 = por %p86, %p87
    %p89 = scmp.ne.s32.totalorder %s80, %s81
    %p90 = scmp.eq.s32.totalorder %s14, 0
    %p91 = por %p89, %p90
    %p92 = scmp.ne.s32.totalorder %s80, %s81
    %p93 = scmp.eq.s32.totalorder %s15, 3
    %p94 = por %p92, %p93
    %p96 = scmp.ne.s32.totalorder %s81, %s95
    %p97 = scmp.eq.s32.totalorder %s15, 0
    %p98 = por %p96, %p97
    %s99 = ssub.s32 %s16, %s28
    %p100 = scmp.eq.s32.totalorder %s99, 0
    %s102 = sadd.s32 %s101, 1
    %s103 = scalar_select %p100, %s101, %s102
    %p106 = pneg %p100
    %p107 = scmp.eq.s32.totalorder %s9, 3
    %p108 = por %p106, %p107
    %p109 = scmp.ne.s32.totalorder %s101, %s104
    %p110 = scmp.eq.s32.totalorder %s9, 0
    %p111 = por %p109, %p110
    %p112 = scmp.ne.s32.totalorder %s101, %s104
    %p113 = scmp.eq.s32.totalorder %s14, 3
    %p114 = por %p112, %p113
    %p115 = scmp.ne.s32.totalorder %s104, %s105
    %p116 = scmp.eq.s32.totalorder %s14, 0
    %p117 = por %p115, %p116
    %p118 = scmp.ne.s32.totalorder %s104, %s105
    %p119 = scmp.eq.s32.totalorder %s15, 3
    %p120 = por %p118, %p119
    %p122 = scmp.ne.s32.totalorder %s105, %s121
    %p123 = scmp.eq.s32.totalorder %s15, 0
    %p124 = por %p122, %p123
    %p125 = scmp.le.s32.totalorder 1, %s9
    %p126 = scmp.lt.s32.totalorder %s9, 5
    %p127 = pnand %p125, %p126
    %p128 = pneg %p127
    // Predicated region
    $region9: #{lenet5_forward.3} parent=5 // pred_check
      _
    $region10: #{lenet5_forward.3} parent=5 // pred_check_branch
      %130 = sbr.rel (%p127) target = $region12
    $region11: #{lenet5_forward.3} parent=5 // pred_region
      %s131 = ssub.s32 %s9, 1
      // Predicated region
      $region13: #{lenet5_forward.3} parent=11 // pred_check
        %p132 = pneg %p42
      $region14: #{lenet5_forward.3} parent=11 // pred_check_branch
        %134 = sbr.rel (%p132) target = $region16
      $region15: #{lenet5_forward.3} parent=11 // pred_region
        _
      $region16: #{lenet5_forward.3} parent=11 // pred_fallthru
        _
      // Predicated region
      $region17: #{lenet5_forward.3} parent=11 // pred_check
        %p135 = pneg %p91
      $region18: #{lenet5_forward.3} parent=11 // pred_check_branch
        %137 = sbr.rel (%p135) target = $region20
      $region19: #{lenet5_forward.3} parent=11 // pred_region
        _
      $region20: #{lenet5_forward.3} parent=11 // pred_fallthru
        _
    $region12: #{lenet5_forward.3} parent=5 // pred_fallthru
      _
    %p138 = scmp.lt.s32.totalorder %s9, 4
    // Predicated region
    $region21: #{lenet5_forward.3} parent=5 // pred_check
      %p139 = pneg %p138
    $region22: #{lenet5_forward.3} parent=5 // pred_check_branch
      %141 = sbr.rel (%p139) target = $region24
    $region23: #{lenet5_forward.3} parent=5 // pred_region
      // Predicated region
      $region25: #{lenet5_forward.3} parent=23 // pred_check
        %p142 = pneg %p64
      $region26: #{lenet5_forward.3} parent=23 // pred_check_branch
        %144 = sbr.rel (%p142) target = $region28
      $region27: #{lenet5_forward.3} parent=23 // pred_region
        %s145 = smul.u32 4, %s16
        %p146 = scmp.lt.s32.totalorder %s17, 3
        %s147 = scalar_select %p146, %s17, 3
        %p148 = scmp.lt.s32.totalorder %s145, 3
        %s149 = scalar_select %p148, %s145, 3
        %s150 = smul.addr %s147, 16
        %s151 = sadd.s32 %s149, %s150
        %s152 = smul.addr %s151, 4
        %s153 = scalar_lea.vmem %s1, %s152
        %s154 = smul.u32 4, %s16
      $region28: #{lenet5_forward.3} parent=23 // pred_fallthru
        _
    $region24: #{lenet5_forward.3} parent=5 // pred_fallthru
      _
    %p155 = scmp.le.s32.totalorder 1, %s9
    %p156 = scmp.lt.s32.totalorder %s9, 5
    %p157 = pnand %p155, %p156
    %p158 = pneg %p157
    // Predicated region
    $region29: #{lenet5_forward.3} parent=5 // pred_check
      _
    $region30: #{lenet5_forward.3} parent=5 // pred_check_branch
      %160 = sbr.rel (%p157) target = $region32
    $region31: #{lenet5_forward.3} parent=5 // pred_region
      %s161 = ssub.s32 %s9, 1
      %p162 = pneg %p42
      %p163 = pneg %p39
      %s164 = smul.u32 4, %s18
      %p165 = scmp.lt.s32.totalorder %s19, 3
      %s166 = scalar_select %p165, %s19, 3
      %p167 = scmp.lt.s32.totalorder %s164, 3
      %s168 = scalar_select %p167, %s164, 3
      %s169 = smul.addr %s166, 16
      %s170 = sadd.s32 %s168, %s169
      %s171 = smul.addr %s170, 4
      %s172 = scalar_lea.vmem %s1, %s171
      %p173 = pneg %p70
      %p174 = pneg %p67
      %p175 = pneg %p91
      %p176 = pneg %p88
      %p177 = pneg %p117
      %p178 = pneg %p114
      %s179 = smul.u32 4, %s18
      %p180 = scmp.lt.s32.totalorder %s179, 3
      %s181 = scalar_select %p180, %s179, 3
      %s182 = smul.addr %s181, 8
      %s183 = scalar_lea.vmem %s3, %s182
      %s184 = smul.u32 4, %s18
      %p185 = scmp.lt.s32.totalorder %s19, 3
      %s186 = scalar_select %p185, %s19, 3
      %p187 = scmp.lt.s32.totalorder %s184, 3
      %s188 = scalar_select %p187, %s184, 3
      %s189 = smul.addr %s186, 16
      %s190 = sadd.s32 %s188, %s189
      %s191 = smul.addr %s190, 4
      %s192 = scalar_lea.vmem %s1, %s191
      %s193 = smul.u32 4, %s18
      %s194 = smul.u32 4, %s18
      %p195 = scmp.lt.s32.totalorder %s194, 3
      %s196 = scalar_select %p195, %s194, 3
      %s197 = smul.addr %s196, 8
      %s198 = scalar_lea.vmem %s3, %s197
      %s199 = smul.u32 4, %s18
      %p201 = scmp.eq.s32.totalorder %s19, 0
      // Predicated region
      $region33: #{lenet5_forward.3} parent=31 // pred_check
        %p202 = pneg %p201
      $region34: #{lenet5_forward.3} parent=31 // pred_check_branch
        %204 = sbr.rel (%p202) target = $region36
      $region35: #{lenet5_forward.3} parent=31 // pred_region
        %205 = vst [vmem:[#allocation2] sm:$0x3f] 0.0
        %206 = vst [vmem:[#allocation2 + $0x8] sm:$0x3f] 0.0
        %207 = vst [vmem:[#allocation2 + $0x10] sm:$0x3f] 0.0
        %208 = vst [vmem:[#allocation2 + $0x18] sm:$0x3f] 0.0
      $region36: #{lenet5_forward.3} parent=31 // pred_fallthru
        _
      %v209 = vld [vmem:[%s0] sm:$0x7]
      %v210 = vld [vmem:[%s192] sm:$0xff]
      %v211 = vld [vmem:[%s192 + $0x8] sm:$0xff]
      %v212 = vld [vmem:[%s192 + $0x10] sm:$0xff]
      %v213 = vld [vmem:[%s192 + $0x18] sm:$0xff]
      %v214 = vld [vmem:[%s192 + $0x20] sm:$0xff]
      %v215 = vld [vmem:[%s192 + $0x28] sm:$0xff]
      %v216 = vld [vmem:[%s192 + $0x30] sm:$0x11]
      %v217 = vld [vmem:[%s192 + $0x38] sm:$0x11]
      %v218 = vld [vmem:[%s2] sm:$0x3f]
      %220 = vset.pattern.permute.xlu0 0
      %221 = vperm.xlu0 %220, %v218
      %v222 = vpop.permute.xlu0 %221
      %v232 = vunpack.c.l.b16 %v210
      %v233 = vunpack.c.h.b16 %v210
      %v234 = vunpack.c.l.b16 %v211
      %v235 = vunpack.c.h.b16 %v211
      %v236 = vunpack.c.l.b16 %v212
      %v237 = vunpack.c.h.b16 %v212
      %v238 = vunpack.c.l.b16 %v213
      %v239 = vunpack.c.h.b16 %v213
      %v240 = vunpack.c.l.b16 %v214
      %v241 = vunpack.c.h.b16 %v214
      %v242 = vunpack.c.l.b16 %v215
      %v243 = vunpack.c.h.b16 %v215
      %v244 = vunpack.c.l.b16 %v216
      %v245 = vunpack.c.h.b16 %v216
      %v246 = vunpack.c.l.b16 %v217
      %v247 = vunpack.c.h.b16 %v217
      %v248 = vpack.c.b16 %v236, %v232
      %v249 = vpack.c.b16 %v237, %v233
      %v250 = vpack.c.b16 %v238, %v234
      %v251 = vpack.c.b16 %v239, %v235
      %v252 = vpack.c.b16 %v244, %v240
      %v253 = vpack.c.b16 %v245, %v241
      %v254 = vpack.c.b16 %v246, %v242
      %v255 = vpack.c.b16 %v247, %v243
      %vm260 = vcmask 203776
      %v262 = vsel %vm260, %v209, 0
      %vm264 = vcmask 1043456
      %vm265 = vcmask 1044480
      %v266 = vsel %vm264, 4294967295, 65535
      %v267 = vsel %vm265, %v266, 0
      %v269 = vand.u32 %v252, %v267
      %v272 = vand.u32 %v253, %v267
      %v275 = vand.u32 %v254, %v267
      %v278 = vand.u32 %v255, %v267
      %280 = vmatpush.bf16.msra.mxu0 0
      %281 = vmatpush.bf16.msra.mxu0 0
      %282 = vmatpush.bf16.msra.mxu0 0
      %283 = vmatpush.bf16.msra.mxu0 0
      %284 = vmatpush.bf16.msra.mxu0 0
      %285 = vmatpush.bf16.msra.mxu0 0
      %286 = vmatpush.bf16.msra.mxu0 %v269
      %287 = vmatpush.bf16.msra.mxu0 %v248
      %288 = vmatmul.bf16.gmra.mxu0 %v262
      %v289 = vpop.f32.mrf.mxu0
      %v290 = vadd.f32 %v222, %v289
      %v291 = vpop.f32.mrf.mxu0
      %292 = vdwg.mxu0
      %293 = vmatpush.bf16.msra.mxu0 0
      %294 = vmatpush.bf16.msra.mxu0 0
      %295 = vmatpush.bf16.msra.mxu0 0
      %296 = vmatpush.bf16.msra.mxu0 0
      %297 = vmatpush.bf16.msra.mxu0 0
      %298 = vmatpush.bf16.msra.mxu0 0
      %299 = vmatpush.bf16.msra.mxu0 %v272
      %300 = vmatpush.bf16.msra.mxu0 %v249
      %301 = vmatmul.bf16.gmra.mxu0 %v262
      %v302 = vpop.f32.mrf.mxu0
      %v303 = vadd.f32 %v222, %v302
      %v304 = vpop.f32.mrf.mxu0
      %305 = vdwg.mxu0
      %306 = vmatpush.bf16.msra.mxu0 0
      %307 = vmatpush.bf16.msra.mxu0 0
      %308 = vmatpush.bf16.msra.mxu0 0
      %309 = vmatpush.bf16.msra.mxu0 0
      %310 = vmatpush.bf16.msra.mxu0 0
      %311 = vmatpush.bf16.msra.mxu0 0
      %312 = vmatpush.bf16.msra.mxu0 %v275
      %313 = vmatpush.bf16.msra.mxu0 %v250
      %314 = vmatmul.bf16.gmra.mxu0 %v262
      %v315 = vpop.f32.mrf.mxu0
      %v316 = vadd.f32 %v222, %v315
      %v317 = vpop.f32.mrf.mxu0
      %318 = vdwg.mxu0
      %319 = vmatpush.bf16.msra.mxu0 0
      %320 = vmatpush.bf16.msra.mxu0 0
      %321 = vmatpush.bf16.msra.mxu0 0
      %322 = vmatpush.bf16.msra.mxu0 0
      %323 = vmatpush.bf16.msra.mxu0 0
      %324 = vmatpush.bf16.msra.mxu0 0
      %325 = vmatpush.bf16.msra.mxu0 %v278
      %326 = vmatpush.bf16.msra.mxu0 %v251
      %327 = vmatmul.bf16.gmra.mxu0 %v262
      %v328 = vpop.f32.mrf.mxu0
      %v329 = vadd.f32 %v222, %v328
      %v330 = vpop.f32.mrf.mxu0
      %331 = vdwg.mxu0
      %vm332 = vcmp.gt.f32.partialorder %v290, 0.0
      %vm333 = vcmp.gt.f32.partialorder %v303, 0.0
      %vm334 = vcmp.gt.f32.partialorder %v316, 0.0
      %vm335 = vcmp.gt.f32.partialorder %v329, 0.0
      %v336 = vmul.f32 %v290, 0.01
      %v337 = vmul.f32 %v303, 0.01
      %v338 = vmul.f32 %v316, 0.01
      %v339 = vmul.f32 %v329, 0.01
      %v340 = vsel %vm332, %v290, %v336
      %v341 = vsel %vm333, %v303, %v337
      %v342 = vsel %vm334, %v316, %v338
      %v343 = vsel %vm335, %v329, %v339
      %v344 = vld [vmem:[#allocation2] sm:$0x3f]
      %v345 = vld [vmem:[#allocation2 + $0x8] sm:$0x3f]
      %v346 = vld [vmem:[#allocation2 + $0x10] sm:$0x3f]
      %v347 = vld [vmem:[#allocation2 + $0x18] sm:$0x3f]
      %v348 = vadd.f32 %v344, %v340
      %v349 = vadd.f32 %v345, %v341
      %v350 = vadd.f32 %v346, %v342
      %v351 = vadd.f32 %v347, %v343
      %352 = vst [vmem:[#allocation2] sm:$0x3f] %v348
      %353 = vst [vmem:[#allocation2 + $0x8] sm:$0x3f] %v349
      %354 = vst [vmem:[#allocation2 + $0x10] sm:$0x3f] %v350
      %355 = vst [vmem:[#allocation2 + $0x18] sm:$0x3f] %v351
      %p356 = scmp.eq.s32.totalorder %s19, 3
      // Predicated region
      $region37: #{lenet5_forward.3} parent=31 // pred_check
        %p357 = pneg %p356
      $region38: #{lenet5_forward.3} parent=31 // pred_check_branch
        %359 = sbr.rel (%p357) target = $region40
      $region39: #{lenet5_forward.3} parent=31 // pred_region
        %v360 = vld [vmem:[#allocation2] sm:$0x3f]
        %v361 = vld [vmem:[#allocation2 + $0x8] sm:$0x3f]
        %v362 = vld [vmem:[#allocation2 + $0x10] sm:$0x3f]
        %v363 = vld [vmem:[#allocation2 + $0x18] sm:$0x3f]
        %v364 = vmul.f32 %v360, 0.25
        %v365 = vmul.f32 %v361, 0.25
        %v366 = vmul.f32 %v362, 0.25
        %v367 = vmul.f32 %v363, 0.25
        %368 = vst [vmem:[%s198] sm:$0x3f] %v364
        %369 = vst [vmem:[%s198 + $0x8] sm:$0x3f] %v365
        %370 = vst [vmem:[%s198 + $0x10] sm:$0x3f] %v366
        %371 = vst [vmem:[%s198 + $0x18] sm:$0x3f] %v367
      $region40: #{lenet5_forward.3} parent=31 // pred_fallthru
        _
      %s372 = smul.u32 4, %s18
      %p373 = scmp.lt.s32.totalorder %s372, 3
      %s374 = scalar_select %p373, %s372, 3
      %s375 = smul.addr %s374, 8
      %s376 = scalar_lea.vmem %s3, %s375
      // Predicated region
      $region41: #{lenet5_forward.3} parent=31 // pred_check
        %p377 = pneg %p114
      $region42: #{lenet5_forward.3} parent=31 // pred_check_branch
        %379 = sbr.rel (%p377) target = $region44
      $region43: #{lenet5_forward.3} parent=31 // pred_region
        %s380 = smul.u32 4, %s18
      $region44: #{lenet5_forward.3} parent=31 // pred_fallthru
        _
      // Predicated region
      $region45: #{lenet5_forward.3} parent=31 // pred_check
        %p381 = pneg %p114
      $region46: #{lenet5_forward.3} parent=31 // pred_check_branch
        %383 = sbr.rel (%p381) target = $region48
      $region47: #{lenet5_forward.3} parent=31 // pred_region
        %s384 = smul.u32 4, %s18
        %p385 = scmp.lt.s32.totalorder %s384, 3
        %s386 = scalar_select %p385, %s384, 3
        %s387 = smul.addr %s386, 8
        %s388 = scalar_lea.vmem %s3, %s387
      $region48: #{lenet5_forward.3} parent=31 // pred_fallthru
        _
    $region32: #{lenet5_forward.3} parent=5 // pred_fallthru
      _
    %p389 = scmp.le.s32.totalorder 2, %s9
    // Predicated region
    $region49: #{lenet5_forward.3} parent=5 // pred_check
      %p390 = pneg %p389
    $region50: #{lenet5_forward.3} parent=5 // pred_check_branch
      %392 = sbr.rel (%p390) target = $region52
    $region51: #{lenet5_forward.3} parent=5 // pred_region
      %s393 = ssub.s32 %s9, 2
    $region52: #{lenet5_forward.3} parent=5 // pred_fallthru
      _
  $region6: #{lenet5_forward.3} parent=0 // loop_footer
    %s13 = sadd.s32 1, %s9
  $region7: #{lenet5_forward.3} parent=0 // loop_footer_branch
    %8 = sbr.rel target = $region3
  $region8: #{lenet5_forward.3} parent=0 // loop_exit
    _

// kernel: lenet5_forward.4
$region0: #{lenet5_forward.4}
  #allocation0 [shape = 'u32[]', space=smem, size = 0x4, offset = 0x4, fixed_abs, tag = 'smem constant byte address 0x4 - core index']
  #allocation1 [shape = 'u32[72,128]{1,0:T(1,128)}', space=vmem, size = 0x9000, scoped, tag = 'internal scratch']
  #allocation2 [shape = 'f32[16,128]{1,0:T(8,128)}', space=vmem, size = 0x2000, scoped, tag = 'scratch operand']
  %s0 = inlined_call_operand.vmem [shape: bf16[16,150], index: 0, kind: input, shape index: {}]
  %s1 = inlined_call_operand.vmem [shape: bf16[4,150,128], index: 1, kind: input, shape index: {}]
  %s2 = inlined_call_operand.vmem [shape: f32[16,1], index: 2, kind: input, shape index: {}]
  %s3 = inlined_call_operand.vmem [shape: f32[16,128], index: 3, kind: output, shape index: {}]
  %s4 = sld [smem:[#allocation0]]
  $region53: #{lenet5_forward.4} parent=0
    _
  %s6 = ssub.s32 1, %s4
  %s7 = scalar_select 0, %s6, %s4
  loop: start=0, step=1, limit=6
  $region2: #{lenet5_forward.4} parent=0 // loop_pre_header
    _
  $region3: #{lenet5_forward.4} parent=0 // loop_header
    %s9 = sphi 0, %s13
    %p10 = scmp.ge.s32.totalorder %s9, 6
    %s16 = sphi 0, %s28
    %s17 = sphi 0, %s24
    %s18 = sphi 0, %s16
    %s19 = sphi 0, %s17
    %s20 = sphi 0, %s18
    %s21 = sphi 0, %s19
    %s29 = sphi 0, %s29
    %s31 = sphi 0, %s29
    %s32 = sphi 0, %s31
    %s46 = sphi 0, %s32
    %s54 = sphi 0, %s56
    %s57 = sphi 0, %s54
    %s58 = sphi 0, %s57
    %s74 = sphi 0, %s58
    %s78 = sphi 0, %s78
    %s80 = sphi 0, %s78
    %s81 = sphi 0, %s80
    %s95 = sphi 0, %s81
    %s101 = sphi 0, %s103
    %s104 = sphi 0, %s101
    %s105 = sphi 0, %s104
    %s121 = sphi 0, %s105
  $region4: #{lenet5_forward.4} parent=0 // loop_header_branch
    %12 = sbr.rel (%p10) target = $region8
  $region5: #{lenet5_forward.4} parent=0 // loop_body
    %s14 = ssub.s32 %s9, 1
    %s15 = ssub.s32 %s9, 2
    %s22 = sadd.s32 1, %s17
    %p23 = scmp.ge.s32.totalorder %s22, 4
    %s24 = scalar_select %p23, 0, %s22
    %s25 = sadd.s32 1, %s16
    %s26 = scalar_select %p23, %s25, %s16
    %p27 = scmp.ge.s32.totalorder %s26, 1
    %s28 = scalar_select %p27, 0, %s26
    %s30 = sadd.s32 %s29, 1
    %p33 = scmp.eq.s32.totalorder %s9, 3
    %p34 = scmp.ne.s32.totalorder %s29, %s31
    %p35 = scmp.eq.s32.totalorder %s9, 0
    %p36 = por %p34, %p35
    %p37 = scmp.ne.s32.totalorder %s29, %s31
    %p38 = scmp.eq.s32.totalorder %s14, 3
    %p39 = por %p37, %p38
    %p40 = scmp.ne.s32.totalorder %s31, %s32
    %p41 = scmp.eq.s32.totalorder %s14, 0
    %p42 = por %p40, %p41
    %p43 = scmp.ne.s32.totalorder %s31, %s32
    %p44 = scmp.eq.s32.totalorder %s15, 3
    %p45 = por %p43, %p44
    %p47 = scmp.ne.s32.totalorder %s32, %s46
    %p48 = scmp.eq.s32.totalorder %s15, 0
    %p49 = por %p47, %p48
    %s50 = ssub.s32 %s17, %s24
    %s51 = ssub.s32 %s16, %s28
    %s52 = sor.u32 %s50, %s51
    %p53 = scmp.eq.s32.totalorder %s52, 0
    %s55 = sadd.s32 %s54, 1
    %s56 = scalar_select %p53, %s54, %s55
    %p59 = pneg %p53
    %p60 = scmp.eq.s32.totalorder %s9, 3
    %p61 = por %p59, %p60
    %p62 = scmp.ne.s32.totalorder %s54, %s57
    %p63 = scmp.eq.s32.totalorder %s9, 0
    %p64 = por %p62, %p63
    %p65 = scmp.ne.s32.totalorder %s54, %s57
    %p66 = scmp.eq.s32.totalorder %s14, 3
    %p67 = por %p65, %p66
    %p68 = scmp.ne.s32.totalorder %s57, %s58
    %p69 = scmp.eq.s32.totalorder %s14, 0
    %p70 = por %p68, %p69
    %p71 = scmp.ne.s32.totalorder %s57, %s58
    %p72 = scmp.eq.s32.totalorder %s15, 3
    %p73 = por %p71, %p72
    %p75 = scmp.ne.s32.totalorder %s58, %s74
    %p76 = scmp.eq.s32.totalorder %s15, 0
    %p77 = por %p75, %p76
    %s79 = sadd.s32 %s78, 1
    %p82 = scmp.eq.s32.totalorder %s9, 3
    %p83 = scmp.ne.s32.totalorder %s78, %s80
    %p84 = scmp.eq.s32.totalorder %s9, 0
    %p85 = por %p83, %p84
    %p86 = scmp.ne.s32.totalorder %s78, %s80
    %p87 = scmp.eq.s32.totalorder %s14, 3
    %p88 = por %p86, %p87
    %p89 = scmp.ne.s32.totalorder %s80, %s81
    %p90 = scmp.eq.s32.totalorder %s14, 0
    %p91 = por %p89, %p90
    %p92 = scmp.ne.s32.totalorder %s80, %s81
    %p93 = scmp.eq.s32.totalorder %s15, 3
    %p94 = por %p92, %p93
    %p96 = scmp.ne.s32.totalorder %s81, %s95
    %p97 = scmp.eq.s32.totalorder %s15, 0
    %p98 = por %p96, %p97
    %s99 = ssub.s32 %s16, %s28
    %p100 = scmp.eq.s32.totalorder %s99, 0
    %s102 = sadd.s32 %s101, 1
    %s103 = scalar_select %p100, %s101, %s102
    %p106 = pneg %p100
    %p107 = scmp.eq.s32.totalorder %s9, 3
    %p108 = por %p106, %p107
    %p109 = scmp.ne.s32.totalorder %s101, %s104
    %p110 = scmp.eq.s32.totalorder %s9, 0
    %p111 = por %p109, %p110
    %p112 = scmp.ne.s32.totalorder %s101, %s104
    %p113 = scmp.eq.s32.totalorder %s14, 3
    %p114 = por %p112, %p113
    %p115 = scmp.ne.s32.totalorder %s104, %s105
    %p116 = scmp.eq.s32.totalorder %s14, 0
    %p117 = por %p115, %p116
    %p118 = scmp.ne.s32.totalorder %s104, %s105
    %p119 = scmp.eq.s32.totalorder %s15, 3
    %p120 = por %p118, %p119
    %p122 = scmp.ne.s32.totalorder %s105, %s121
    %p123 = scmp.eq.s32.totalorder %s15, 0
    %p124 = por %p122, %p123
    %p125 = scmp.le.s32.totalorder 1, %s9
    %p126 = scmp.lt.s32.totalorder %s9, 5
    %p127 = pnand %p125, %p126
    %p128 = pneg %p127
    // Predicated region
    $region9: #{lenet5_forward.4} parent=5 // pred_check
      _
    $region10: #{lenet5_forward.4} parent=5 // pred_check_branch
      %130 = sbr.rel (%p127) target = $region12
    $region11: #{lenet5_forward.4} parent=5 // pred_region
      %s131 = ssub.s32 %s9, 1
      // Predicated region
      $region13: #{lenet5_forward.4} parent=11 // pred_check
        %p132 = pneg %p42
      $region14: #{lenet5_forward.4} parent=11 // pred_check_branch
        %134 = sbr.rel (%p132) target = $region16
      $region15: #{lenet5_forward.4} parent=11 // pred_region
        _
      $region16: #{lenet5_forward.4} parent=11 // pred_fallthru
        _
      // Predicated region
      $region17: #{lenet5_forward.4} parent=11 // pred_check
        %p135 = pneg %p91
      $region18: #{lenet5_forward.4} parent=11 // pred_check_branch
        %137 = sbr.rel (%p135) target = $region20
      $region19: #{lenet5_forward.4} parent=11 // pred_region
        _
      $region20: #{lenet5_forward.4} parent=11 // pred_fallthru
        _
    $region12: #{lenet5_forward.4} parent=5 // pred_fallthru
      _
    %p138 = scmp.lt.s32.totalorder %s9, 4
    // Predicated region
    $region21: #{lenet5_forward.4} parent=5 // pred_check
      %p139 = pneg %p138
    $region22: #{lenet5_forward.4} parent=5 // pred_check_branch
      %141 = sbr.rel (%p139) target = $region24
    $region23: #{lenet5_forward.4} parent=5 // pred_region
      // Predicated region
      $region25: #{lenet5_forward.4} parent=23 // pred_check
        %p142 = pneg %p64
      $region26: #{lenet5_forward.4} parent=23 // pred_check_branch
        %144 = sbr.rel (%p142) target = $region28
      $region27: #{lenet5_forward.4} parent=23 // pred_region
        %p145 = scmp.lt.s32.totalorder %s17, 3
        %s146 = scalar_select %p145, %s17, 3
        %p147 = scmp.lt.s32.totalorder %s16, 0
        %s148 = scalar_select %p147, %s16, 0
        %s149 = smul.addr %s146, 19
        %s150 = sadd.s32 %s148, %s149
        %s151 = smul.addr %s150, 4
        %s152 = scalar_lea.vmem %s1, %s151
      $region28: #{lenet5_forward.4} parent=23 // pred_fallthru
        _
    $region24: #{lenet5_forward.4} parent=5 // pred_fallthru
      _
    %p153 = scmp.le.s32.totalorder 1, %s9
    %p154 = scmp.lt.s32.totalorder %s9, 5
    %p155 = pnand %p153, %p154
    %p156 = pneg %p155
    // Predicated region
    $region29: #{lenet5_forward.4} parent=5 // pred_check
      _
    $region30: #{lenet5_forward.4} parent=5 // pred_check_branch
      %158 = sbr.rel (%p155) target = $region32
    $region31: #{lenet5_forward.4} parent=5 // pred_region
      %s159 = ssub.s32 %s9, 1
      %p160 = pneg %p42
      %p161 = pneg %p39
      %p162 = scmp.lt.s32.totalorder %s19, 3
      %s163 = scalar_select %p162, %s19, 3
      %p164 = scmp.lt.s32.totalorder %s18, 0
      %s165 = scalar_select %p164, %s18, 0
      %s166 = smul.addr %s163, 19
      %s167 = sadd.s32 %s165, %s166
      %s168 = smul.addr %s167, 4
      %s169 = scalar_lea.vmem %s1, %s168
      %p170 = pneg %p70
      %p171 = pneg %p67
      %p172 = pneg %p91
      %p173 = pneg %p88
      %p174 = pneg %p117
      %p175 = pneg %p114
      %p176 = scmp.lt.s32.totalorder %s18, 0
      %s177 = scalar_select %p176, %s18, 0
      %s178 = smul.addr %s177, 8
      %s179 = scalar_lea.vmem %s3, %s178
      %p180 = scmp.lt.s32.totalorder %s19, 3
      %s181 = scalar_select %p180, %s19, 3
      %p182 = scmp.lt.s32.totalorder %s18, 0
      %s183 = scalar_select %p182, %s18, 0
      %s184 = smul.addr %s181, 19
      %s185 = sadd.s32 %s183, %s184
      %s186 = smul.addr %s185, 4
      %s187 = scalar_lea.vmem %s1, %s186
      %p188 = scmp.lt.s32.totalorder %s18, 0
      %s189 = scalar_select %p188, %s18, 0
      %s190 = smul.addr %s189, 8
      %s191 = scalar_lea.vmem %s3, %s190
      %p193 = scmp.eq.s32.totalorder %s19, 0
      // Predicated region
      $region33: #{lenet5_forward.4} parent=31 // pred_check
        %p194 = pneg %p193
      $region34: #{lenet5_forward.4} parent=31 // pred_check_branch
        %196 = sbr.rel (%p194) target = $region36
      $region35: #{lenet5_forward.4} parent=31 // pred_region
        %197 = vst [vmem:[#allocation2] sm:$0xff] 0.0
        %198 = vst [vmem:[#allocation2 + $0x8] sm:$0xff] 0.0
      $region36: #{lenet5_forward.4} parent=31 // pred_fallthru
        _
      %v199 = vld [vmem:[%s0] sm:$0xff]
      %v200 = vld [vmem:[%s0 + $0x8] sm:$0xff]
      %v201 = vld [vmem:[%s187] sm:$0xf]
      %v202 = vld [vmem:[%s187 + $0x4] sm:$0xf]
      %v203 = vld [vmem:[%s187 + $0x8] sm:$0xf]
      %v204 = vld [vmem:[%s187 + $0xc] sm:$0xf]
      %v205 = vld [vmem:[%s187 + $0x10] sm:$0xf]
      %v206 = vld [vmem:[%s187 + $0x14] sm:$0xf]
      %v207 = vld [vmem:[%s187 + $0x18] sm:$0xf]
      %v208 = vld [vmem:[%s187 + $0x1c] sm:$0xf]
      %v209 = vld [vmem:[%s187 + $0x20] sm:$0xf]
      %v210 = vld [vmem:[%s187 + $0x24] sm:$0xf]
      %v211 = vld [vmem:[%s187 + $0x28] sm:$0xf]
      %v212 = vld [vmem:[%s187 + $0x2c] sm:$0xf]
      %v213 = vld [vmem:[%s187 + $0x30] sm:$0xf]
      %v214 = vld [vmem:[%s187 + $0x34] sm:$0xf]
      %v215 = vld [vmem:[%s187 + $0x38] sm:$0xf]
      %v216 = vld [vmem:[%s187 + $0x3c] sm:$0xf]
      %v217 = vld [vmem:[%s187 + $0x40] sm:$0xf]
      %v218 = vld [vmem:[%s187 + $0x44] sm:$0xf]
      %v219 = vld [vmem:[%s187 + $0x48] sm:$0x7]
      %v220 = vld [vmem:[%s2] sm:$0xff]
      %v221 = vld [vmem:[%s2 + $0x8] sm:$0xff]
      %223 = vset.pattern.permute.xlu0 0
      %224 = vperm.xlu0 %223, %v220
      %v225 = vpop.permute.xlu0 %224
      %228 = vset.pattern.permute.xlu0 0
      %229 = vperm.xlu0 %228, %v221
      %v230 = vpop.permute.xlu0 %229
      %v234 = vunpack.c.l.b16 %v199
      %v235 = vunpack.c.h.b16 %v199
      %v236 = vunpack.c.l.b16 %v200
      %v237 = vunpack.c.h.b16 %v200
      %v238 = vpack.c.b16 %v236, %v234
      %v239 = vpack.c.b16 %v237, %v235
      %v260 = vunpack.c.l.b16 %v201
      %v261 = vunpack.c.l.b16 %v202
      %v262 = vunpack.c.l.b16 %v203
      %v263 = vunpack.c.l.b16 %v204
      %v264 = vunpack.c.l.b16 %v205
      %v265 = vunpack.c.l.b16 %v206
      %v266 = vunpack.c.l.b16 %v207
      %v267 = vunpack.c.l.b16 %v208
      %v268 = vunpack.c.l.b16 %v209
      %v269 = vunpack.c.l.b16 %v210
      %v270 = vunpack.c.l.b16 %v211
      %v271 = vunpack.c.l.b16 %v212
      %v272 = vunpack.c.l.b16 %v213
      %v273 = vunpack.c.l.b16 %v214
      %v274 = vunpack.c.l.b16 %v215
      %v275 = vunpack.c.l.b16 %v216
      %v276 = vunpack.c.l.b16 %v217
      %v277 = vunpack.c.l.b16 %v218
      %v278 = vunpack.c.l.b16 %v219
      %v279 = vpack.c.b16 %v261, %v260
      %v280 = vpack.c.b16 %v263, %v262
      %v281 = vpack.c.b16 %v265, %v264
      %v282 = vpack.c.b16 %v267, %v266
      %v283 = vpack.c.b16 %v269, %v268
      %v284 = vpack.c.b16 %v271, %v270
      %v285 = vpack.c.b16 %v273, %v272
      %v286 = vpack.c.b16 %v275, %v274
      %v287 = vpack.c.b16 %v277, %v276
      %v288 = vpack.c.b16 %v278, %v278
      %vm298 = vcmask 179200
      %v300 = vsel %vm298, %v239, 0
      %vm302 = vcmask 1042432
      %v304 = vsel %vm302, %v288, 0
      %306 = vmatpush.bf16.msra.mxu0 %v286
      %307 = vmatpush.bf16.msra.mxu0 %v285
      %308 = vmatpush.bf16.msra.mxu0 %v284
      %309 = vmatpush.bf16.msra.mxu0 %v283
      %310 = vmatpush.bf16.msra.mxu0 %v282
      %311 = vmatpush.bf16.msra.mxu0 %v281
      %312 = vmatpush.bf16.msra.mxu0 %v280
      %313 = vmatpush.bf16.msra.mxu0 %v279
      %314 = vmatmul.bf16.gmra.mxu0 %v238
      %v315 = vpop.f32.mrf.mxu0
      %v316 = vadd.f32 %v225, %v315
      %v317 = vpop.f32.mrf.mxu0
      %v318 = vadd.f32 %v230, %v317
      %319 = vdwg.mxu0
      %320 = vmatpush.bf16.msra.mxu0 0
      %321 = vmatpush.bf16.msra.mxu0 0
      %322 = vmatpush.bf16.msra.mxu0 0
      %323 = vmatpush.bf16.msra.mxu0 0
      %324 = vmatpush.bf16.msra.mxu0 0
      %325 = vmatpush.bf16.msra.mxu0 0
      %326 = vmatpush.bf16.msra.mxu0 %v304
      %327 = vmatpush.bf16.msra.mxu0 %v287
      %328 = vmatmul.bf16.gmra.mxu0 %v300
      %v329 = vpop.f32.mrf.mxu0
      %v330 = vadd.f32 %v316, %v329
      %v331 = vpop.f32.mrf.mxu0
      %v332 = vadd.f32 %v318, %v331
      %333 = vdwg.mxu0
      %vm334 = vcmp.gt.f32.partialorder %v330, 0.0
      %vm335 = vcmp.gt.f32.partialorder %v332, 0.0
      %v336 = vmul.f32 %v330, 0.01
      %v337 = vmul.f32 %v332, 0.01
      %v338 = vsel %vm334, %v330, %v336
      %v339 = vsel %vm335, %v332, %v337
      %v340 = vld [vmem:[#allocation2] sm:$0xff]
      %v341 = vld [vmem:[#allocation2 + $0x8] sm:$0xff]
      %v342 = vadd.f32 %v340, %v338
      %v343 = vadd.f32 %v341, %v339
      %344 = vst [vmem:[#allocation2] sm:$0xff] %v342
      %345 = vst [vmem:[#allocation2 + $0x8] sm:$0xff] %v343
      %p346 = scmp.eq.s32.totalorder %s19, 3
      // Predicated region
      $region37: #{lenet5_forward.4} parent=31 // pred_check
        %p347 = pneg %p346
      $region38: #{lenet5_forward.4} parent=31 // pred_check_branch
        %349 = sbr.rel (%p347) target = $region40
      $region39: #{lenet5_forward.4} parent=31 // pred_region
        %v350 = vld [vmem:[#allocation2] sm:$0xff]
        %v351 = vld [vmem:[#allocation2 + $0x8] sm:$0xff]
        %v352 = vmul.f32 %v350, 0.25
        %v353 = vmul.f32 %v351, 0.25
        %354 = vst [vmem:[%s191] sm:$0xff] %v352
        %355 = vst [vmem:[%s191 + $0x8] sm:$0xff] %v353
      $region40: #{lenet5_forward.4} parent=31 // pred_fallthru
        _
      %p356 = scmp.lt.s32.totalorder %s18, 0
      %s357 = scalar_select %p356, %s18, 0
      %s358 = smul.addr %s357, 8
      %s359 = scalar_lea.vmem %s3, %s358
      // Predicated region
      $region41: #{lenet5_forward.4} parent=31 // pred_check
        %p360 = pneg %p114
      $region42: #{lenet5_forward.4} parent=31 // pred_check_branch
        %362 = sbr.rel (%p360) target = $region44
      $region43: #{lenet5_forward.4} parent=31 // pred_region
        _
      $region44: #{lenet5_forward.4} parent=31 // pred_fallthru
        _
      // Predicated region
      $region45: #{lenet5_forward.4} parent=31 // pred_check
        %p363 = pneg %p114
      $region46: #{lenet5_forward.4} parent=31 // pred_check_branch
        %365 = sbr.rel (%p363) target = $region48
      $region47: #{lenet5_forward.4} parent=31 // pred_region
        %p366 = scmp.lt.s32.totalorder %s18, 0
        %s367 = scalar_select %p366, %s18, 0
        %s368 = smul.addr %s367, 8
        %s369 = scalar_lea.vmem %s3, %s368
      $region48: #{lenet5_forward.4} parent=31 // pred_fallthru
        _
    $region32: #{lenet5_forward.4} parent=5 // pred_fallthru
      _
    %p370 = scmp.le.s32.totalorder 2, %s9
    // Predicated region
    $region49: #{lenet5_forward.4} parent=5 // pred_check
      %p371 = pneg %p370
    $region50: #{lenet5_forward.4} parent=5 // pred_check_branch
      %373 = sbr.rel (%p371) target = $region52
    $region51: #{lenet5_forward.4} parent=5 // pred_region
      %s374 = ssub.s32 %s9, 2
    $region52: #{lenet5_forward.4} parent=5 // pred_fallthru
      _
  $region6: #{lenet5_forward.4} parent=0 // loop_footer
    %s13 = sadd.s32 1, %s9
  $region7: #{lenet5_forward.4} parent=0 // loop_footer_branch
    %8 = sbr.rel target = $region3
  $region8: #{lenet5_forward.4} parent=0 // loop_exit
    _

// kernel: lenet5_forward.5
$region0: #{lenet5_forward.5}
  #allocation0 [shape = 'u32[]', space=smem, size = 0x4, offset = 0x4, fixed_abs, tag = 'smem constant byte address 0x4 - core index']
  #allocation1 [shape = 'u32[72,128]{1,0:T(1,128)}', space=vmem, size = 0x9000, scoped, tag = 'internal scratch']
  %s0 = inlined_call_operand.vmem [shape: bf16[400,128], index: 0, kind: input, shape index: {}]
  %s1 = inlined_call_operand.vmem [shape: bf16[120,400], index: 1, kind: input, shape index: {}]
  %s2 = inlined_call_operand.vmem [shape: f32[120,1], index: 2, kind: input, shape index: {}]
  %s3 = inlined_call_operand.vmem [shape: bf16[84,120], index: 3, kind: input, shape index: {}]
  %s4 = inlined_call_operand.vmem [shape: f32[84,1], index: 4, kind: input, shape index: {}]
  %s5 = inlined_call_operand.vmem [shape: bf16[10,84], index: 5, kind: input, shape index: {}]
  %s6 = inlined_call_operand.vmem [shape: f32[10,1], index: 6, kind: input, shape index: {}]
  %s7 = inlined_call_operand.vmem [shape: f32[10,128], index: 7, kind: output, shape index: {}]
  %s8 = sld [smem:[#allocation0]]
  $region38: #{lenet5_forward.5} parent=0
    _
  %s10 = ssub.s32 1, %s8
  %s11 = scalar_select 0, %s10, %s8
  // Predicated region
  $region2: #{lenet5_forward.5} parent=0 // pred_check
    _
  $region3: #{lenet5_forward.5} parent=0 // pred_check_branch
    %13 = sbr.rel (0) target = $region5
  $region4: #{lenet5_forward.5} parent=0 // pred_region
    _
  $region5: #{lenet5_forward.5} parent=0 // pred_fallthru
    _
  // Predicated region
  $region6: #{lenet5_forward.5} parent=0 // pred_check
    _
  $region7: #{lenet5_forward.5} parent=0 // pred_check_branch
    %15 = sbr.rel (0) target = $region9
  $region8: #{lenet5_forward.5} parent=0 // pred_region
    _
  $region9: #{lenet5_forward.5} parent=0 // pred_fallthru
    _
  // Predicated region
  $region10: #{lenet5_forward.5} parent=0 // pred_check
    _
  $region11: #{lenet5_forward.5} parent=0 // pred_check_branch
    %17 = sbr.rel (0) target = $region13
  $region12: #{lenet5_forward.5} parent=0 // pred_region
    _
  $region13: #{lenet5_forward.5} parent=0 // pred_fallthru
    _
  // Predicated region
  $region14: #{lenet5_forward.5} parent=0 // pred_check
    _
  $region15: #{lenet5_forward.5} parent=0 // pred_check_branch
    %19 = sbr.rel (0) target = $region17
  $region16: #{lenet5_forward.5} parent=0 // pred_region
    _
  $region17: #{lenet5_forward.5} parent=0 // pred_fallthru
    _
  // Predicated region
  $region18: #{lenet5_forward.5} parent=0 // pred_check
    _
  $region19: #{lenet5_forward.5} parent=0 // pred_check_branch
    %21 = sbr.rel (0) target = $region21
  $region20: #{lenet5_forward.5} parent=0 // pred_region
    _
  $region21: #{lenet5_forward.5} parent=0 // pred_fallthru
    _
  // Predicated region
  $region22: #{lenet5_forward.5} parent=0 // pred_check
    _
  $region23: #{lenet5_forward.5} parent=0 // pred_check_branch
    %23 = sbr.rel (0) target = $region25
  $region24: #{lenet5_forward.5} parent=0 // pred_region
    _
  $region25: #{lenet5_forward.5} parent=0 // pred_fallthru
    _
  // Predicated region
  $region26: #{lenet5_forward.5} parent=0 // pred_check
    _
  $region27: #{lenet5_forward.5} parent=0 // pred_check_branch
    %25 = sbr.rel (0) target = $region29
  $region28: #{lenet5_forward.5} parent=0 // pred_region
    _
  $region29: #{lenet5_forward.5} parent=0 // pred_fallthru
    _
  %v27 = vld [vmem:[%s1] sm:$0xff]
  %v28 = vld [vmem:[%s1 + $0x8] sm:$0xff]
  %v29 = vld [vmem:[%s1 + $0x10] sm:$0xff]
  %v30 = vld [vmem:[%s1 + $0x18] sm:$0xff]
  %v31 = vld [vmem:[%s1 + $0x20] sm:$0xff]
  %v32 = vld [vmem:[%s1 + $0x28] sm:$0xff]
  %v33 = vld [vmem:[%s1 + $0x30] sm:$0xff]
  %v34 = vld [vmem:[%s1 + $0x38] sm:$0xff]
  %v35 = vld [vmem:[%s1 + $0x40] sm:$0xff]
  %v36 = vld [vmem:[%s1 + $0x48] sm:$0xff]
  %v37 = vld [vmem:[%s1 + $0x50] sm:$0xff]
  %v38 = vld [vmem:[%s1 + $0x58] sm:$0xff]
  %v39 = vld [vmem:[%s1 + $0x60] sm:$0xff]
  %v40 = vld [vmem:[%s1 + $0x68] sm:$0xff]
  %v41 = vld [vmem:[%s1 + $0x70] sm:$0xff]
  %v42 = vld [vmem:[%s1 + $0x78] sm:$0xff]
  %v43 = vld [vmem:[%s1 + $0x80] sm:$0xff]
  %v44 = vld [vmem:[%s1 + $0x88] sm:$0xff]
  %v45 = vld [vmem:[%s1 + $0x90] sm:$0xff]
  %v46 = vld [vmem:[%s1 + $0x98] sm:$0xff]
  %v47 = vld [vmem:[%s1 + $0xa0] sm:$0xff]
  %v48 = vld [vmem:[%s1 + $0xa8] sm:$0xff]
  %v49 = vld [vmem:[%s1 + $0xb0] sm:$0xff]
  %v50 = vld [vmem:[%s1 + $0xb8] sm:$0xff]
  %v51 = vld [vmem:[%s1 + $0xc0] sm:$0xff]
  %v52 = vld [vmem:[%s1 + $0xc8] sm:$0xff]
  %v53 = vld [vmem:[%s1 + $0xd0] sm:$0xff]
  %v54 = vld [vmem:[%s1 + $0xd8] sm:$0xff]
  %v55 = vld [vmem:[%s1 + $0xe0] sm:$0xff]
  %v56 = vld [vmem:[%s1 + $0xe8] sm:$0xff]
  %v57 = vld [vmem:[%s0] sm:$0xf]
  %v58 = vld [vmem:[%s0 + $0x4] sm:$0xf]
  %v59 = vld [vmem:[%s0 + $0x8] sm:$0xf]
  %v60 = vld [vmem:[%s0 + $0xc] sm:$0xf]
  %v61 = vld [vmem:[%s0 + $0x10] sm:$0xf]
  %v62 = vld [vmem:[%s0 + $0x14] sm:$0xf]
  %v63 = vld [vmem:[%s0 + $0x18] sm:$0xf]
  %v64 = vld [vmem:[%s0 + $0x1c] sm:$0xf]
  %v65 = vld [vmem:[%s0 + $0x20] sm:$0xf]
  %v66 = vld [vmem:[%s0 + $0x24] sm:$0xf]
  %v67 = vld [vmem:[%s0 + $0x28] sm:$0xf]
  %v68 = vld [vmem:[%s0 + $0x2c] sm:$0xf]
  %v69 = vld [vmem:[%s0 + $0x30] sm:$0xf]
  %v70 = vld [vmem:[%s0 + $0x34] sm:$0xf]
  %v71 = vld [vmem:[%s0 + $0x38] sm:$0xf]
  %v72 = vld [vmem:[%s0 + $0x3c] sm:$0xf]
  %v73 = vld [vmem:[%s0 + $0x40] sm:$0xf]
  %v74 = vld [vmem:[%s0 + $0x44] sm:$0xf]
  %v75 = vld [vmem:[%s0 + $0x48] sm:$0xf]
  %v76 = vld [vmem:[%s0 + $0x4c] sm:$0xf]
  %v77 = vld [vmem:[%s0 + $0x50] sm:$0xf]
  %v78 = vld [vmem:[%s0 + $0x54] sm:$0xf]
  %v79 = vld [vmem:[%s0 + $0x58] sm:$0xf]
  %v80 = vld [vmem:[%s0 + $0x5c] sm:$0xf]
  %v81 = vld [vmem:[%s0 + $0x60] sm:$0xf]
  %v82 = vld [vmem:[%s0 + $0x64] sm:$0xf]
  %v83 = vld [vmem:[%s0 + $0x68] sm:$0xf]
  %v84 = vld [vmem:[%s0 + $0x6c] sm:$0xf]
  %v85 = vld [vmem:[%s0 + $0x70] sm:$0xf]
  %v86 = vld [vmem:[%s0 + $0x74] sm:$0xf]
  %v87 = vld [vmem:[%s0 + $0x78] sm:$0xf]
  %v88 = vld [vmem:[%s0 + $0x7c] sm:$0xf]
  %v89 = vld [vmem:[%s0 + $0x80] sm:$0xf]
  %v90 = vld [vmem:[%s0 + $0x84] sm:$0xf]
  %v91 = vld [vmem:[%s0 + $0x88] sm:$0xf]
  %v92 = vld [vmem:[%s0 + $0x8c] sm:$0xf]
  %v93 = vld [vmem:[%s0 + $0x90] sm:$0xf]
  %v94 = vld [vmem:[%s0 + $0x94] sm:$0xf]
  %v95 = vld [vmem:[%s0 + $0x98] sm:$0xf]
  %v96 = vld [vmem:[%s0 + $0x9c] sm:$0xf]
  %v97 = vld [vmem:[%s0 + $0xa0] sm:$0xf]
  %v98 = vld [vmem:[%s0 + $0xa4] sm:$0xf]
  %v99 = vld [vmem:[%s0 + $0xa8] sm:$0xf]
  %v100 = vld [vmem:[%s0 + $0xac] sm:$0xf]
  %v101 = vld [vmem:[%s0 + $0xb0] sm:$0xf]
  %v102 = vld [vmem:[%s0 + $0xb4] sm:$0xf]
  %v103 = vld [vmem:[%s0 + $0xb8] sm:$0xf]
  %v104 = vld [vmem:[%s0 + $0xbc] sm:$0xf]
  %v105 = vld [vmem:[%s0 + $0xc0] sm:$0xf]
  %v106 = vld [vmem:[%s0 + $0xc4] sm:$0xf]
  %v107 = vld [vmem:[%s2] sm:$0xff]
  %v108 = vld [vmem:[%s2 + $0x8] sm:$0xff]
  %v109 = vld [vmem:[%s2 + $0x10] sm:$0xff]
  %v110 = vld [vmem:[%s2 + $0x18] sm:$0xff]
  %v111 = vld [vmem:[%s2 + $0x20] sm:$0xff]
  %v112 = vld [vmem:[%s2 + $0x28] sm:$0xff]
  %v113 = vld [vmem:[%s2 + $0x30] sm:$0xff]
  %v114 = vld [vmem:[%s2 + $0x38] sm:$0xff]
  %v115 = vld [vmem:[%s2 + $0x40] sm:$0xff]
  %v116 = vld [vmem:[%s2 + $0x48] sm:$0xff]
  %v117 = vld [vmem:[%s2 + $0x50] sm:$0xff]
  %v118 = vld [vmem:[%s2 + $0x58] sm:$0xff]
  %v119 = vld [vmem:[%s2 + $0x60] sm:$0xff]
  %v120 = vld [vmem:[%s2 + $0x68] sm:$0xff]
  %v121 = vld [vmem:[%s2 + $0x70] sm:$0xff]
  %123 = vset.pattern.permute.xlu0 0
  %124 = vperm.xlu0 %123, %v107
  %v125 = vpop.permute.xlu0 %124
  %128 = vset.pattern.permute.xlu0 0
  %129 = vperm.xlu0 %128, %v108
  %v130 = vpop.permute.xlu0 %129
  %133 = vset.pattern.permute.xlu0 0
  %134 = vperm.xlu0 %133, %v109
  %v135 = vpop.permute.xlu0 %134
  %138 = vset.pattern.permute.xlu0 0
  %139 = vperm.xlu0 %138, %v110
  %v140 = vpop.permute.xlu0 %139
  %143 = vset.pattern.permute.xlu0 0
  %144 = vperm.xlu0 %143, %v111
  %v145 = vpop.permute.xlu0 %144
  %148 = vset.pattern.permute.xlu0 0
  %149 = vperm.xlu0 %148, %v112
  %v150 = vpop.permute.xlu0 %149
  %153 = vset.pattern.permute.xlu0 0
  %154 = vperm.xlu0 %153, %v113
  %v155 = vpop.permute.xlu0 %154
  %158 = vset.pattern.permute.xlu0 0
  %159 = vperm.xlu0 %158, %v114
  %v160 = vpop.permute.xlu0 %159
  %163 = vset.pattern.permute.xlu0 0
  %164 = vperm.xlu0 %163, %v115
  %v165 = vpop.permute.xlu0 %164
  %168 = vset.pattern.permute.xlu0 0
  %169 = vperm.xlu0 %168, %v116
  %v170 = vpop.permute.xlu0 %169
  %173 = vset.pattern.permute.xlu0 0
  %174 = vperm.xlu0 %173, %v117
  %v175 = vpop.permute.xlu0 %174
  %178 = vset.pattern.permute.xlu0 0
  %179 = vperm.xlu0 %178, %v118
  %v180 = vpop.permute.xlu0 %179
  %183 = vset.pattern.permute.xlu0 0
  %184 = vperm.xlu0 %183, %v119
  %v185 = vpop.permute.xlu0 %184
  %188 = vset.pattern.permute.xlu0 0
  %189 = vperm.xlu0 %188, %v120
  %v190 = vpop.permute.xlu0 %189
  %193 = vset.pattern.permute.xlu0 0
  %194 = vperm.xlu0 %193, %v121
  %v195 = vpop.permute.xlu0 %194
  %v227 = vunpack.c.l.b16 %v27
  %v228 = vunpack.c.h.b16 %v27
  %v229 = vunpack.c.l.b16 %v28
  %v230 = vunpack.c.h.b16 %v28
  %v231 = vunpack.c.l.b16 %v29
  %v232 = vunpack.c.h.b16 %v29
  %v233 = vunpack.c.l.b16 %v30
  %v234 = vunpack.c.h.b16 %v30
  %v235 = vunpack.c.l.b16 %v31
  %v236 = vunpack.c.h.b16 %v31
  %v237 = vunpack.c.l.b16 %v32
  %v238 = vunpack.c.h.b16 %v32
  %v239 = vunpack.c.l.b16 %v33
  %v240 = vunpack.c.h.b16 %v33
  %v241 = vunpack.c.l.b16 %v34
  %v242 = vunpack.c.h.b16 %v34
  %v243 = vunpack.c.l.b16 %v35
  %v244 = vunpack.c.h.b16 %v35
  %v245 = vunpack.c.l.b16 %v36
  %v246 = vunpack.c.h.b16 %v36
  %v247 = vunpack.c.l.b16 %v37
  %v248 = vunpack.c.h.b16 %v37
  %v249 = vunpack.c.l.b16 %v38
  %v250 = vunpack.c.h.b16 %v38
  %v251 = vunpack.c.l.b16 %v39
  %v252 = vunpack.c.h.b16 %v39
  %v253 = vunpack.c.l.b16 %v40
  %v254 = vunpack.c.h.b16 %v40
  %v255 = vunpack.c.l.b16 %v41
  %v256 = vunpack.c.h.b16 %v41
  %v257 = vunpack.c.l.b16 %v42
  %v258 = vunpack.c.h.b16 %v42
  %v259 = vunpack.c.l.b16 %v43
  %v260 = vunpack.c.h.b16 %v43
  %v261 = vunpack.c.l.b16 %v44
  %v262 = vunpack.c.h.b16 %v44
  %v263 = vunpack.c.l.b16 %v45
  %v264 = vunpack.c.h.b16 %v45
  %v265 = vunpack.c.l.b16 %v46
  %v266 = vunpack.c.h.b16 %v46
  %v267 = vunpack.c.l.b16 %v47
  %v268 = vunpack.c.h.b16 %v47
  %v269 = vunpack.c.l.b16 %v48
  %v270 = vunpack.c.h.b16 %v48
  %v271 = vunpack.c.l.b16 %v49
  %v272 = vunpack.c.h.b16 %v49
  %v273 = vunpack.c.l.b16 %v50
  %v274 = vunpack.c.h.b16 %v50
  %v275 = vunpack.c.l.b16 %v51
  %v276 = vunpack.c.h.b16 %v51
  %v277 = vunpack.c.l.b16 %v52
  %v278 = vunpack.c.h.b16 %v52
  %v279 = vunpack.c.l.b16 %v53
  %v280 = vunpack.c.h.b16 %v53
  %v281 = vunpack.c.l.b16 %v54
  %v282 = vunpack.c.h.b16 %v54
  %v283 = vunpack.c.l.b16 %v55
  %v284 = vunpack.c.h.b16 %v55
  %v285 = vunpack.c.l.b16 %v56
  %v286 = vunpack.c.h.b16 %v56
  %v287 = vpack.c.b16 %v231, %v227
  %v288 = vpack.c.b16 %v232, %v228
  %v289 = vpack.c.b16 %v233, %v229
  %v290 = vpack.c.b16 %v234, %v230
  %v291 = vpack.c.b16 %v239, %v235
  %v292 = vpack.c.b16 %v240, %v236
  %v293 = vpack.c.b16 %v241, %v237
  %v294 = vpack.c.b16 %v242, %v238
  %v295 = vpack.c.b16 %v247, %v243
  %v296 = vpack.c.b16 %v248, %v244
  %v297 = vpack.c.b16 %v249, %v245
  %v298 = vpack.c.b16 %v250, %v246
  %v299 = vpack.c.b16 %v255, %v251
  %v300 = vpack.c.b16 %v256, %v252
  %v301 = vpack.c.b16 %v257, %v253
  %v302 = vpack.c.b16 %v258, %v254
  %v303 = vpack.c.b16 %v263, %v259
  %v304 = vpack.c.b16 %v264, %v260
  %v305 = vpack.c.b16 %v265, %v261
  %v306 = vpack.c.b16 %v266, %v262
  %v307 = vpack.c.b16 %v271, %v267
  %v308 = vpack.c.b16 %v272, %v268
  %v309 = vpack.c.b16 %v273, %v269
  %v310 = vpack.c.b16 %v274, %v270
  %v311 = vpack.c.b16 %v279, %v275
  %v312 = vpack.c.b16 %v280, %v276
  %v313 = vpack.c.b16 %v281, %v277
  %v314 = vpack.c.b16 %v282, %v278
  %v315 = vpack.c.b16 %v283, %v283
  %v316 = vpack.c.b16 %v284, %v284
  %v317 = vpack.c.b16 %v285, %v285
  %v318 = vpack.c.b16 %v286, %v286
  %v393 = vunpack.c.l.b16 %v57
  %v394 = vunpack.c.l.b16 %v58
  %v395 = vunpack.c.l.b16 %v59
  %v396 = vunpack.c.l.b16 %v60
  %v397 = vunpack.c.l.b16 %v61
  %v398 = vunpack.c.l.b16 %v62
  %v399 = vunpack.c.l.b16 %v63
  %v400 = vunpack.c.l.b16 %v64
  %v401 = vunpack.c.l.b16 %v65
  %v402 = vunpack.c.l.b16 %v66
  %v403 = vunpack.c.l.b16 %v67
  %v404 = vunpack.c.l.b16 %v68
  %v405 = vunpack.c.l.b16 %v69
  %v406 = vunpack.c.l.b16 %v70
  %v407 = vunpack.c.l.b16 %v71
  %v408 = vunpack.c.l.b16 %v72
  %v409 = vunpack.c.l.b16 %v73
  %v410 = vunpack.c.l.b16 %v74
  %v411 = vunpack.c.l.b16 %v75
  %v412 = vunpack.c.l.b16 %v76
  %v413 = vunpack.c.l.b16 %v77
  %v414 = vunpack.c.l.b16 %v78
  %v415 = vunpack.c.l.b16 %v79
  %v416 = vunpack.c.l.b16 %v80
  %v417 = vunpack.c.l.b16 %v81
  %v418 = vunpack.c.l.b16 %v82
  %v419 = vunpack.c.l.b16 %v83
  %v420 = vunpack.c.l.b16 %v84
  %v421 = vunpack.c.l.b16 %v85
  %v422 = vunpack.c.l.b16 %v86
  %v423 = vunpack.c.l.b16 %v87
  %v424 = vunpack.c.l.b16 %v88
  %v425 = vunpack.c.l.b16 %v89
  %v426 = vunpack.c.l.b16 %v90
  %v427 = vunpack.c.l.b16 %v91
  %v428 = vunpack.c.l.b16 %v92
  %v429 = vunpack.c.l.b16 %v93
  %v430 = vunpack.c.l.b16 %v94
  %v431 = vunpack.c.l.b16 %v95
  %v432 = vunpack.c.l.b16 %v96
  %v433 = vunpack.c.l.b16 %v97
  %v434 = vunpack.c.l.b16 %v98
  %v435 = vunpack.c.l.b16 %v99
  %v436 = vunpack.c.l.b16 %v100
  %v437 = vunpack.c.l.b16 %v101
  %v438 = vunpack.c.l.b16 %v102
  %v439 = vunpack.c.l.b16 %v103
  %v440 = vunpack.c.l.b16 %v104
  %v441 = vunpack.c.l.b16 %v105
  %v442 = vunpack.c.l.b16 %v106
  %v443 = vpack.c.b16 %v394, %v393
  %v444 = vpack.c.b16 %v396, %v395
  %v445 = vpack.c.b16 %v398, %v397
  %v446 = vpack.c.b16 %v400, %v399
  %v447 = vpack.c.b16 %v402, %v401
  %v448 = vpack.c.b16 %v404, %v403
  %v449 = vpack.c.b16 %v406, %v405
  %v450 = vpack.c.b16 %v408, %v407
  %v451 = vpack.c.b16 %v410, %v409
  %v452 = vpack.c.b16 %v412, %v411
  %v453 = vpack.c.b16 %v414, %v413
  %v454 = vpack.c.b16 %v416, %v415
  %v455 = vpack.c.b16 %v418, %v417
  %v456 = vpack.c.b16 %v420, %v419
  %v457 = vpack.c.b16 %v422, %v421
  %v458 = vpack.c.b16 %v424, %v423
  %v459 = vpack.c.b16 %v426, %v425
  %v460 = vpack.c.b16 %v428, %v427
  %v461 = vpack.c.b16 %v430, %v429
  %v462 = vpack.c.b16 %v432, %v431
  %v463 = vpack.c.b16 %v434, %v433
  %v464 = vpack.c.b16 %v436, %v435
  %v465 = vpack.c.b16 %v438, %v437
  %v466 = vpack.c.b16 %v440, %v439
  %v467 = vpack.c.b16 %v442, %v441
  %vm493 = vcmask 130048
  %v495 = vsel %vm493, %v290, 0
  %v498 = vsel %vm493, %v294, 0
  %v501 = vsel %vm493, %v298, 0
  %v504 = vsel %vm493, %v302, 0
  %v507 = vsel %vm493, %v306, 0
  %v510 = vsel %vm493, %v310, 0
  %v513 = vsel %vm493, %v314, 0
  %v516 = vsel %vm493, %v318, 0
  %518 = vmatpush.bf16.msra.mxu0 %v450
  %519 = vmatpush.bf16.msra.mxu0 %v449
  %520 = vmatpush.bf16.msra.mxu0 %v448
  %521 = vmatpush.bf16.msra.mxu0 %v447
  %522 = vmatpush.bf16.msra.mxu0 %v446
  %523 = vmatpush.bf16.msra.mxu0 %v445
  %524 = vmatpush.bf16.msra.mxu0 %v444
  %525 = vmatpush.bf16.msra.mxu0 %v443
  %526 = vmatmul.bf16.gmra.mxu0 %v287
  %v527 = vpop.f32.mrf.mxu0
  %v528 = vadd.f32 %v125, %v527
  %v529 = vpop.f32.mrf.mxu0
  %v530 = vadd.f32 %v130, %v529
  %531 = vmatmul.bf16.gmra.mxu0 %v291
  %v532 = vpop.f32.mrf.mxu0
  %v533 = vadd.f32 %v135, %v532
  %v534 = vpop.f32.mrf.mxu0
  %v535 = vadd.f32 %v140, %v534
  %536 = vmatmul.bf16.gmra.mxu0 %v295
  %v537 = vpop.f32.mrf.mxu0
  %v538 = vadd.f32 %v145, %v537
  %v539 = vpop.f32.mrf.mxu0
  %v540 = vadd.f32 %v150, %v539
  %541 = vmatmul.bf16.gmra.mxu0 %v299
  %v542 = vpop.f32.mrf.mxu0
  %v543 = vadd.f32 %v155, %v542
  %v544 = vpop.f32.mrf.mxu0
  %v545 = vadd.f32 %v160, %v544
  %546 = vmatmul.bf16.gmra.mxu0 %v303
  %v547 = vpop.f32.mrf.mxu0
  %v548 = vadd.f32 %v165, %v547
  %v549 = vpop.f32.mrf.mxu0
  %v550 = vadd.f32 %v170, %v549
  %551 = vmatmul.bf16.gmra.mxu0 %v307
  %v552 = vpop.f32.mrf.mxu0
  %v553 = vadd.f32 %v175, %v552
  %v554 = vpop.f32.mrf.mxu0
  %v555 = vadd.f32 %v180, %v554
  %556 = vmatmul.bf16.gmra.mxu0 %v311
  %v557 = vpop.f32.mrf.mxu0
  %v558 = vadd.f32 %v185, %v557
  %v559 = vpop.f32.mrf.mxu0
  %v560 = vadd.f32 %v190, %v559
  %561 = vmatmul.bf16.gmra.mxu0 %v315
  %v562 = vpop.f32.mrf.mxu0
  %v563 = vadd.f32 %v195, %v562
  %v564 = vpop.f32.mrf.mxu0
  %565 = vdwg.mxu0
  %566 = vmatpush.bf16.msra.mxu0 %v458
  %567 = vmatpush.bf16.msra.mxu0 %v457
  %568 = vmatpush.bf16.msra.mxu0 %v456
  %569 = vmatpush.bf16.msra.mxu0 %v455
  %570 = vmatpush.bf16.msra.mxu0 %v454
  %571 = vmatpush.bf16.msra.mxu0 %v453
  %572 = vmatpush.bf16.msra.mxu0 %v452
  %573 = vmatpush.bf16.msra.mxu0 %v451
  %574 = vmatmul.bf16.gmra.mxu0 %v288
  %v575 = vpop.f32.mrf.mxu0
  %v576 = vadd.f32 %v528, %v575
  %v577 = vpop.f32.mrf.mxu0
  %v578 = vadd.f32 %v530, %v577
  %579 = vmatmul.bf16.gmra.mxu0 %v292
  %v580 = vpop.f32.mrf.mxu0
  %v581 = vadd.f32 %v533, %v580
  %v582 = vpop.f32.mrf.mxu0
  %v583 = vadd.f32 %v535, %v582
  %584 = vmatmul.bf16.gmra.mxu0 %v296
  %v585 = vpop.f32.mrf.mxu0
  %v586 = vadd.f32 %v538, %v585
  %v587 = vpop.f32.mrf.mxu0
  %v588 = vadd.f32 %v540, %v587
  %589 = vmatmul.bf16.gmra.mxu0 %v300
  %v590 = vpop.f32.mrf.mxu0
  %v591 = vadd.f32 %v543, %v590
  %v592 = vpop.f32.mrf.mxu0
  %v593 = vadd.f32 %v545, %v592
  %594 = vmatmul.bf16.gmra.mxu0 %v304
  %v595 = vpop.f32.mrf.mxu0
  %v596 = vadd.f32 %v548, %v595
  %v597 = vpop.f32.mrf.mxu0
  %v598 = vadd.f32 %v550, %v597
  %599 = vmatmul.bf16.gmra.mxu0 %v308
  %v600 = vpop.f32.mrf.mxu0
  %v601 = vadd.f32 %v553, %v600
  %v602 = vpop.f32.mrf.mxu0
  %v603 = vadd.f32 %v555, %v602
  %604 = vmatmul.bf16.gmra.mxu0 %v312
  %v605 = vpop.f32.mrf.mxu0
  %v606 = vadd.f32 %v558, %v605
  %v607 = vpop.f32.mrf.mxu0
  %v608 = vadd.f32 %v560, %v607
  %609 = vmatmul.bf16.gmra.mxu0 %v316
  %v610 = vpop.f32.mrf.mxu0
  %v611 = vadd.f32 %v563, %v610
  %v612 = vpop.f32.mrf.mxu0
  %613 = vdwg.mxu0
  %614 = vmatpush.bf16.msra.mxu0 %v466
  %615 = vmatpush.bf16.msra.mxu0 %v465
  %616 = vmatpush.bf16.msra.mxu0 %v464
  %617 = vmatpush.bf16.msra.mxu0 %v463
  %618 = vmatpush.bf16.msra.mxu0 %v462
  %619 = vmatpush.bf16.msra.mxu0 %v461
  %620 = vmatpush.bf16.msra.mxu0 %v460
  %621 = vmatpush.bf16.msra.mxu0 %v459
  %622 = vmatmul.bf16.gmra.mxu0 %v289
  %v623 = vpop.f32.mrf.mxu0
  %v624 = vadd.f32 %v576, %v623
  %v625 = vpop.f32.mrf.mxu0
  %v626 = vadd.f32 %v578, %v625
  %627 = vmatmul.bf16.gmra.mxu0 %v293
  %v628 = vpop.f32.mrf.mxu0
  %v629 = vadd.f32 %v581, %v628
  %v630 = vpop.f32.mrf.mxu0
  %v631 = vadd.f32 %v583, %v630
  %632 = vmatmul.bf16.gmra.mxu0 %v297
  %v633 = vpop.f32.mrf.mxu0
  %v634 = vadd.f32 %v586, %v633
  %v635 = vpop.f32.mrf.mxu0
  %v636 = vadd.f32 %v588, %v635
  %637 = vmatmul.bf16.gmra.mxu0 %v301
  %v638 = vpop.f32.mrf.mxu0
  %v639 = vadd.f32 %v591, %v638
  %v640 = vpop.f32.mrf.mxu0
  %v641 = vadd.f32 %v593, %v640
  %642 = vmatmul.bf16.gmra.mxu0 %v305
  %v643 = vpop.f32.mrf.mxu0
  %v644 = vadd.f32 %v596, %v643
  %v645 = vpop.f32.mrf.mxu0
  %v646 = vadd.f32 %v598, %v645
  %647 = vmatmul.bf16.gmra.mxu0 %v309
  %v648 = vpop.f32.mrf.mxu0
  %v649 = vadd.f32 %v601, %v648
  %v650 = vpop.f32.mrf.mxu0
  %v651 = vadd.f32 %v603, %v650
  %652 = vmatmul.bf16.gmra.mxu0 %v313
  %v653 = vpop.f32.mrf.mxu0
  %v654 = vadd.f32 %v606, %v653
  %v655 = vpop.f32.mrf.mxu0
  %v656 = vadd.f32 %v608, %v655
  %657 = vmatmul.bf16.gmra.mxu0 %v317
  %v658 = vpop.f32.mrf.mxu0
  %v659 = vadd.f32 %v611, %v658
  %v660 = vpop.f32.mrf.mxu0
  %661 = vdwg.mxu0
  %662 = vmatpush.bf16.msra.mxu0 0
  %663 = vmatpush.bf16.msra.mxu0 0
  %664 = vmatpush.bf16.msra.mxu0 0
  %665 = vmatpush.bf16.msra.mxu0 0
  %666 = vmatpush.bf16.msra.mxu0 0
  %667 = vmatpush.bf16.msra.mxu0 0
  %668 = vmatpush.bf16.msra.mxu0 0
  %669 = vmatpush.bf16.msra.mxu0 %v467
  %670 = vmatmul.bf16.gmra.mxu0 %v495
  %v671 = vpop.f32.mrf.mxu0
  %v672 = vadd.f32 %v624, %v671
  %v673 = vpop.f32.mrf.mxu0
  %v674 = vadd.f32 %v626, %v673
  %675 = vmatmul.bf16.gmra.mxu0 %v498
  %v676 = vpop.f32.mrf.mxu0
  %v677 = vadd.f32 %v629, %v676
  %v678 = vpop.f32.mrf.mxu0
  %v679 = vadd.f32 %v631, %v678
  %680 = vmatmul.bf16.gmra.mxu0 %v501
  %v681 = vpop.f32.mrf.mxu0
  %v682 = vadd.f32 %v634, %v681
  %v683 = vpop.f32.mrf.mxu0
  %v684 = vadd.f32 %v636, %v683
  %685 = vmatmul.bf16.gmra.mxu0 %v504
  %v686 = vpop.f32.mrf.mxu0
  %v687 = vadd.f32 %v639, %v686
  %v688 = vpop.f32.mrf.mxu0
  %v689 = vadd.f32 %v641, %v688
  %690 = vmatmul.bf16.gmra.mxu0 %v507
  %v691 = vpop.f32.mrf.mxu0
  %v692 = vadd.f32 %v644, %v691
  %v693 = vpop.f32.mrf.mxu0
  %v694 = vadd.f32 %v646, %v693
  %695 = vmatmul.bf16.gmra.mxu0 %v510
  %v696 = vpop.f32.mrf.mxu0
  %v697 = vadd.f32 %v649, %v696
  %v698 = vpop.f32.mrf.mxu0
  %v699 = vadd.f32 %v651, %v698
  %700 = vmatmul.bf16.gmra.mxu0 %v513
  %v701 = vpop.f32.mrf.mxu0
  %v702 = vadd.f32 %v654, %v701
  %v703 = vpop.f32.mrf.mxu0
  %v704 = vadd.f32 %v656, %v703
  %705 = vmatmul.bf16.gmra.mxu0 %v516
  %v706 = vpop.f32.mrf.mxu0
  %v707 = vadd.f32 %v659, %v706
  %v708 = vpop.f32.mrf.mxu0
  %709 = vdwg.mxu0
  %v710 = vmax.f32 %v672, 0.0
  %v711 = vmax.f32 %v674, 0.0
  %v712 = vmax.f32 %v677, 0.0
  %v713 = vmax.f32 %v679, 0.0
  %v714 = vmax.f32 %v682, 0.0
  %v715 = vmax.f32 %v684, 0.0
  %v716 = vmax.f32 %v687, 0.0
  %v717 = vmax.f32 %v689, 0.0
  %v718 = vmax.f32 %v692, 0.0
  %v719 = vmax.f32 %v694, 0.0
  %v720 = vmax.f32 %v697, 0.0
  %v721 = vmax.f32 %v699, 0.0
  %v722 = vmax.f32 %v702, 0.0
  %v723 = vmax.f32 %v704, 0.0
  %v724 = vmax.f32 %v707, 0.0
  %v725 = vld [vmem:[%s3] sm:$0xf]
  %v726 = vld [vmem:[%s3 + $0x4] sm:$0xf]
  %v727 = vld [vmem:[%s3 + $0x8] sm:$0xf]
  %v728 = vld [vmem:[%s3 + $0xc] sm:$0xf]
  %v729 = vld [vmem:[%s3 + $0x10] sm:$0xf]
  %v730 = vld [vmem:[%s3 + $0x14] sm:$0xf]
  %v731 = vld [vmem:[%s3 + $0x18] sm:$0xf]
  %v732 = vld [vmem:[%s3 + $0x1c] sm:$0xf]
  %v733 = vld [vmem:[%s3 + $0x20] sm:$0xf]
  %v734 = vld [vmem:[%s3 + $0x24] sm:$0xf]
  %v735 = vld [vmem:[%s3 + $0x28] sm:$0x3]
  %v736 = vpack.c.bf16 %v711, %v710
  %v737 = vpack.c.bf16 %v713, %v712
  %v738 = vpack.c.bf16 %v715, %v714
  %v739 = vpack.c.bf16 %v717, %v716
  %v740 = vpack.c.bf16 %v719, %v718
  %v741 = vpack.c.bf16 %v721, %v720
  %v742 = vpack.c.bf16 %v723, %v722
  %v743 = vpack.c.bf16 %v724, %v724
  %v744 = vld [vmem:[%s4] sm:$0xff]
  %v745 = vld [vmem:[%s4 + $0x8] sm:$0xff]
  %v746 = vld [vmem:[%s4 + $0x10] sm:$0xff]
  %v747 = vld [vmem:[%s4 + $0x18] sm:$0xff]
  %v748 = vld [vmem:[%s4 + $0x20] sm:$0xff]
  %v749 = vld [vmem:[%s4 + $0x28] sm:$0xff]
  %v750 = vld [vmem:[%s4 + $0x30] sm:$0xff]
  %v751 = vld [vmem:[%s4 + $0x38] sm:$0xff]
  %v752 = vld [vmem:[%s4 + $0x40] sm:$0xff]
  %v753 = vld [vmem:[%s4 + $0x48] sm:$0xff]
  %v754 = vld [vmem:[%s4 + $0x50] sm:$0xf]
  %756 = vset.pattern.permute.xlu0 0
  %757 = vperm.xlu0 %756, %v744
  %v758 = vpop.permute.xlu0 %757
  %761 = vset.pattern.permute.xlu0 0
  %762 = vperm.xlu0 %761, %v745
  %v763 = vpop.permute.xlu0 %762
  %766 = vset.pattern.permute.xlu0 0
  %767 = vperm.xlu0 %766, %v746
  %v768 = vpop.permute.xlu0 %767
  %771 = vset.pattern.permute.xlu0 0
  %772 = vperm.xlu0 %771, %v747
  %v773 = vpop.permute.xlu0 %772
  %776 = vset.pattern.permute.xlu0 0
  %777 = vperm.xlu0 %776, %v748
  %v778 = vpop.permute.xlu0 %777
  %781 = vset.pattern.permute.xlu0 0
  %782 = vperm.xlu0 %781, %v749
  %v783 = vpop.permute.xlu0 %782
  %786 = vset.pattern.permute.xlu0 0
  %787 = vperm.xlu0 %786, %v750
  %v788 = vpop.permute.xlu0 %787
  %791 = vset.pattern.permute.xlu0 0
  %792 = vperm.xlu0 %791, %v751
  %v793 = vpop.permute.xlu0 %792
  %796 = vset.pattern.permute.xlu0 0
  %797 = vperm.xlu0 %796, %v752
  %v798 = vpop.permute.xlu0 %797
  %801 = vset.pattern.permute.xlu0 0
  %802 = vperm.xlu0 %801, %v753
  %v803 = vpop.permute.xlu0 %802
  %806 = vset.pattern.permute.xlu0 0
  %807 = vperm.xlu0 %806, %v754
  %v808 = vpop.permute.xlu0 %807
  %v821 = vunpack.c.l.b16 %v725
  %v822 = vunpack.c.l.b16 %v726
  %v823 = vunpack.c.l.b16 %v727
  %v824 = vunpack.c.l.b16 %v728
  %v825 = vunpack.c.l.b16 %v729
  %v826 = vunpack.c.l.b16 %v730
  %v827 = vunpack.c.l.b16 %v731
  %v828 = vunpack.c.l.b16 %v732
  %v829 = vunpack.c.l.b16 %v733
  %v830 = vunpack.c.l.b16 %v734
  %v831 = vunpack.c.l.b16 %v735
  %v832 = vpack.c.b16 %v822, %v821
  %v833 = vpack.c.b16 %v824, %v823
  %v834 = vpack.c.b16 %v826, %v825
  %v835 = vpack.c.b16 %v828, %v827
  %v836 = vpack.c.b16 %v830, %v829
  %v837 = vpack.c.b16 %v831, %v831
  %vm838 = vcmask 982016
  %v840 = vsel %vm838, %v832, 0
  %v843 = vsel %vm838, %v833, 0
  %v846 = vsel %vm838, %v834, 0
  %v849 = vsel %vm838, %v835, 0
  %v852 = vsel %vm838, %v836, 0
  %v855 = vsel %vm838, %v837, 0
  %vm857 = vcmask 1043456
  %v859 = vsel %vm857, %v743, 0
  %861 = vmatpush.bf16.msra.mxu0 %v859
  %862 = vmatpush.bf16.msra.mxu0 %v742
  %863 = vmatpush.bf16.msra.mxu0 %v741
  %864 = vmatpush.bf16.msra.mxu0 %v740
  %865 = vmatpush.bf16.msra.mxu0 %v739
  %866 = vmatpush.bf16.msra.mxu0 %v738
  %867 = vmatpush.bf16.msra.mxu0 %v737
  %868 = vmatpush.bf16.msra.mxu0 %v736
  %869 = vmatmul.bf16.gmra.mxu0 %v840
  %v870 = vpop.f32.mrf.mxu0
  %v871 = vadd.f32 %v758, %v870
  %v872 = vpop.f32.mrf.mxu0
  %v873 = vadd.f32 %v763, %v872
  %874 = vmatmul.bf16.gmra.mxu0 %v843
  %v875 = vpop.f32.mrf.mxu0
  %v876 = vadd.f32 %v768, %v875
  %v877 = vpop.f32.mrf.mxu0
  %v878 = vadd.f32 %v773, %v877
  %879 = vmatmul.bf16.gmra.mxu0 %v846
  %v880 = vpop.f32.mrf.mxu0
  %v881 = vadd.f32 %v778, %v880
  %v882 = vpop.f32.mrf.mxu0
  %v883 = vadd.f32 %v783, %v882
  %884 = vmatmul.bf16.gmra.mxu0 %v849
  %v885 = vpop.f32.mrf.mxu0
  %v886 = vadd.f32 %v788, %v885
  %v887 = vpop.f32.mrf.mxu0
  %v888 = vadd.f32 %v793, %v887
  %889 = vmatmul.bf16.gmra.mxu0 %v852
  %v890 = vpop.f32.mrf.mxu0
  %v891 = vadd.f32 %v798, %v890
  %v892 = vpop.f32.mrf.mxu0
  %v893 = vadd.f32 %v803, %v892
  %894 = vmatmul.bf16.gmra.mxu0 %v855
  %v895 = vpop.f32.mrf.mxu0
  %v896 = vadd.f32 %v808, %v895
  %v897 = vpop.f32.mrf.mxu0
  %898 = vdwg.mxu0
  %v899 = vmax.f32 %v871, 0.0
  %v900 = vmax.f32 %v873, 0.0
  %v901 = vmax.f32 %v876, 0.0
  %v902 = vmax.f32 %v878, 0.0
  %v903 = vmax.f32 %v881, 0.0
  %v904 = vmax.f32 %v883, 0.0
  %v905 = vmax.f32 %v886, 0.0
  %v906 = vmax.f32 %v888, 0.0
  %v907 = vmax.f32 %v891, 0.0
  %v908 = vmax.f32 %v893, 0.0
  %v909 = vmax.f32 %v896, 0.0
  %v910 = vld [vmem:[%s5] sm:$0xf]
  %v911 = vld [vmem:[%s5 + $0x4] sm:$0x1]
  %v912 = vpack.c.bf16 %v900, %v899
  %v913 = vpack.c.bf16 %v902, %v901
  %v914 = vpack.c.bf16 %v904, %v903
  %v915 = vpack.c.bf16 %v906, %v905
  %v916 = vpack.c.bf16 %v908, %v907
  %v917 = vpack.c.bf16 %v909, %v909
  %v918 = vld [vmem:[%s6] sm:$0xff]
  %v919 = vld [vmem:[%s6 + $0x8] sm:$0x3]
  %921 = vset.pattern.permute.xlu0 0
  %922 = vperm.xlu0 %921, %v918
  %v923 = vpop.permute.xlu0 %922
  %926 = vset.pattern.permute.xlu0 0
  %927 = vperm.xlu0 %926, %v919
  %v928 = vpop.permute.xlu0 %927
  %v932 = vunpack.c.l.b16 %v910
  %v933 = vunpack.c.l.b16 %v911
  %v934 = vpack.c.b16 %v933, %v932
  %vm935 = vcmask 687104
  %v937 = vsel %vm935, %v934, 0
  %vm939 = vcmask 1041408
  %v941 = vsel %vm939, %v917, 0
  %943 = vmatpush.bf16.msra.mxu0 0
  %944 = vmatpush.bf16.msra.mxu0 0
  %945 = vmatpush.bf16.msra.mxu0 %v941
  %946 = vmatpush.bf16.msra.mxu0 %v916
  %947 = vmatpush.bf16.msra.mxu0 %v915
  %948 = vmatpush.bf16.msra.mxu0 %v914
  %949 = vmatpush.bf16.msra.mxu0 %v913
  %950 = vmatpush.bf16.msra.mxu0 %v912
  %951 = vmatmul.bf16.gmra.mxu0 %v937
  %v952 = vpop.f32.mrf.mxu0
  %v953 = vadd.f32 %v923, %v952
  %v954 = vpop.f32.mrf.mxu0
  %v955 = vadd.f32 %v928, %v954
  %956 = vdwg.mxu0
  %957 = vst [vmem:[%s7] sm:$0xff] %v953
  %958 = vst [vmem:[%s7 + $0x8] sm:$0x3] %v955
  // Predicated region
  $region30: #{lenet5_forward.5} parent=0 // pred_check
    _
  $region31: #{lenet5_forward.5} parent=0 // pred_check_branch
    %960 = sbr.rel (0) target = $region33
  $region32: #{lenet5_forward.5} parent=0 // pred_region
    _
  $region33: #{lenet5_forward.5} parent=0 // pred_fallthru
    _
  // Predicated region
  $region34: #{lenet5_forward.5} parent=0 // pred_check
    _
  $region35: #{lenet5_forward.5} parent=0 // pred_check_branch
    %962 = sbr.rel (0) target = $region37
  $region36: #{lenet5_forward.5} parent=0 // pred_region
    _
  $region37: #{lenet5_forward.5} parent=0 // pred_fallthru
    _

</llo_original>
